<compile_context>
chip_gen: v7x
topology: tpu7x:2x2x1
jax: 0.10.0
libtpu: 0.0.40
codegen_flags: <defaults>
</compile_context>

<pallas_src>
import jax
import jax.numpy as jnp
from jax.experimental import pallas as pl
from jax.experimental.pallas import tpu as pltpu


def fused_kernel(x113_ref, x135_ref, w1_ref, w2_ref, bias_ref, out_ref):
    # conv1 with x118-mul and BN scale folded into w1 (bf16 weights):
    #   h = w1_eff @ x113   : (112, 480) @ (480, HW) -> (112, HW), f32 acc
    h = jnp.dot(w1_ref[...], x113_ref[...].astype(jnp.bfloat16),
                preferred_element_type=jnp.float32)
    # residual add (BN shift is carried through conv2 as bias_ref)
    y = (x135_ref[...] + h).astype(jnp.bfloat16)
    # conv2 output-channel block: (blk, 112) @ (112, HW) + bias -> (blk, HW)
    out_ref[...] = (jnp.dot(w2_ref[...], y, preferred_element_type=jnp.float32)
                    + bias_ref[...])


def run_module(x118, x113, x135, w1, w2, gamma, beta, run_mean, run_var,
               eps=1e-3):
    """All array args in PyTorch conventions:
       x118 (N,480,1,1), x113 (N,480,H,W), x135 (N,112,H,W),
       w1 (112,480,1,1), w2 (672,112,1,1), BN params (112,).
    """
    N, C_in, H, W = x113.shape
    assert N == 1  # TODO(synk): generalize to N>1 with a batch grid axis
    HW = H * W
    C_mid = w1.shape[0]       # 112
    C_out = w2.shape[0]       # 672

    # zero-copy channel-major reshapes (N == 1): NCHW -> (C, HW)
    x113_m = x113.reshape(C_in, HW)            # (480, 196)
    x135_m = x135.reshape(C_mid, HW)           # (112, 196)

    # Fold BN (inference form) and the x118 broadcast-mul into the weights,
    # in f32, then cast weights to bf16 for the MXU.
    inv_std = 1.0 / jnp.sqrt(run_var + eps)
    scale = gamma * inv_std                    # (112,)
    shift = beta - run_mean * scale            # (112,)
    w1_oi = w1.reshape(C_mid, C_in)            # (112, 480)
    w2_oi = w2.reshape(C_out, C_mid)           # (672, 112)
    w1_eff = (scale[:, None] * w1_oi) * x118.reshape(1, C_in)   # (112, 480) f32
    bias2 = jnp.dot(w2_oi, shift).reshape(C_out, 1)             # (672, 1)  f32

    w1_bf = w1_eff.astype(jnp.bfloat16)
    w2_bf = w2_oi.astype(jnp.bfloat16)

    n_blk = 2                       # 2-way split over output channels
    blk = C_out // n_blk            # 336 (multiple of 8 / 16)

    out = pl.pallas_call(
        fused_kernel,
        out_shape=jax.ShapeDtypeStruct((C_out, HW), jnp.float32),
        grid=(n_blk,),
        in_specs=[
            pl.BlockSpec((C_in, HW),    lambda i: (0, 0)),   # x113  (480, 196)
            pl.BlockSpec((C_mid, HW),   lambda i: (0, 0)),   # x135  (112, 196)
            pl.BlockSpec((C_mid, C_in), lambda i: (0, 0)),   # w1_eff (112, 480)
            pl.BlockSpec((blk, C_mid),  lambda i: (i, 0)),   # w2 block (336, 112)
            pl.BlockSpec((blk, 1),      lambda i: (i, 0)),   # bias block (336, 1)
        ],
        out_specs=pl.BlockSpec((blk, HW), lambda i: (i, 0)),  # (336, 196)
        compiler_params=pltpu.CompilerParams(
            dimension_semantics=("parallel",),
            vmem_limit_bytes=8 << 20),
    )(x113_m, x135_m, w1_bf, w2_bf, bias2)

    # (672, 196) is already channel-major -> NCHW, zero-copy reshape
    return out.reshape(1, C_out, H, W)


def reference(x118, x113, x135, w1, w2, gamma, beta, run_mean, run_var,
              eps=1e-3):
    x119 = x118 * x113
    x120 = jax.lax.conv_general_dilated(
        x119, w1, (1, 1), "VALID", dimension_numbers=("NCHW", "OIHW", "NCHW"))
    inv_std = 1.0 / jnp.sqrt(run_var + eps)
    x121 = (x120 - run_mean[None, :, None, None]) * inv_std[None, :, None, None] \
        * gamma[None, :, None, None] + beta[None, :, None, None]
    x136 = x135 + x121
    x137 = jax.lax.conv_general_dilated(
        x136, w2, (1, 1), "VALID", dimension_numbers=("NCHW", "OIHW", "NCHW"))
    return x137


if __name__ == "__main__":
    key = jax.random.PRNGKey(0)
    ks = jax.random.split(key, 9)

    N, H, W = 1, 14, 14
    C_in, C_mid, C_out = 480, 112, 672

    # module inputs (PyTorch NCHW shapes)
    x113 = jax.random.normal(ks[0], (N, C_in, H, W), jnp.float32)
    x118 = jax.random.normal(ks[1], (N, C_in, 1, 1), jnp.float32)
    x135 = jax.random.normal(ks[2], (N, C_mid, H, W), jnp.float32)

    # deterministic parameter init
    w1 = jax.random.normal(ks[3], (C_mid, C_in, 1, 1), jnp.float32) * 0.05
    w2 = jax.random.normal(ks[4], (C_out, C_mid, 1, 1), jnp.float32) * 0.05
    gamma = jax.random.normal(ks[5], (C_mid,), jnp.float32) * 0.1 + 1.0
    beta = jax.random.normal(ks[6], (C_mid,), jnp.float32) * 0.1
    run_mean = jax.random.normal(ks[7], (C_mid,), jnp.float32) * 0.1
    run_var = jnp.abs(jax.random.normal(ks[8], (C_mid,), jnp.float32)) * 0.1 + 1.0

    out = run_module(x118, x113, x135, w1, w2, gamma, beta, run_mean, run_var)
    out = jax.block_until_ready(out)

    ref = jax.block_until_ready(
        reference(x118, x113, x135, w1, w2, gamma, beta, run_mean, run_var))

    assert out.shape == (N, C_out, H, W), out.shape
    # bf16 matmul inputs with f32 accumulation -> bf16-appropriate tolerance
    assert jnp.allclose(out, ref, rtol=2e-2, atol=2e-2), "mismatch vs reference"
    print("KERNEL_OK")
</pallas_src>

<mosaic_0001>
module attributes {stable_mosaic.version = 11 : i64} {
  func.func @fused_kernel(%arg0: i32, %arg1: memref<480x196xf32, #tpu.memory_space<vmem>>, %arg2: memref<112x196xf32, #tpu.memory_space<vmem>>, %arg3: memref<112x480xbf16, #tpu.memory_space<vmem>>, %arg4: memref<336x112xbf16, #tpu.memory_space<vmem>>, %arg5: memref<336x1xf32, #tpu.memory_space<vmem>>, %arg6: memref<336x196xf32, #tpu.memory_space<vmem>>) attributes {dimension_semantics = [#tpu.dimension_semantics<parallel>], iteration_bounds = array<i64: 2>, scalar_prefetch = 0 : i64, scratch_operands = 0 : i64, tpu.core_type = #tpu.core_type<tc>, window_params = [{pipeline_mode = #tpu.pipeline_mode<synchronous>, transform_indices = @transform_0, window_bounds = array<i64: 480, 196>}, {pipeline_mode = #tpu.pipeline_mode<synchronous>, transform_indices = @transform_1, window_bounds = array<i64: 112, 196>}, {pipeline_mode = #tpu.pipeline_mode<synchronous>, transform_indices = @transform_2, window_bounds = array<i64: 112, 480>}, {transform_indices = @transform_3, window_bounds = array<i64: 336, 112>}, {transform_indices = @transform_4, window_bounds = array<i64: 336, 1>}, {transform_indices = @transform_5, window_bounds = array<i64: 336, 196>}]} {
    %c0 = arith.constant 0 : index
    %c0_0 = arith.constant 0 : index
    %0 = vector.load %arg3[%c0, %c0_0] : memref<112x480xbf16, #tpu.memory_space<vmem>>, vector<112x480xbf16>
    %c0_1 = arith.constant 0 : index
    %c0_2 = arith.constant 0 : index
    %1 = vector.load %arg1[%c0_1, %c0_2] : memref<480x196xf32, #tpu.memory_space<vmem>>, vector<480x196xf32>
    %2 = arith.truncf %1 : vector<480x196xf32> to vector<480x196xbf16>
    %cst = arith.constant dense<0.000000e+00> : vector<112x196xf32>
    %3 = tpu.matmul %0, %2, %cst {dimension_numbers = #tpu.dot_dimension_numbers<[1], [0], [0], [1], [0, 0, 1, 1], [], []>} : vector<112x480xbf16>, vector<480x196xbf16>, vector<112x196xf32> -> vector<112x196xf32>
    %c0_3 = arith.constant 0 : index
    %c0_4 = arith.constant 0 : index
    %4 = vector.load %arg2[%c0_3, %c0_4] : memref<112x196xf32, #tpu.memory_space<vmem>>, vector<112x196xf32>
    %5 = arith.addf %4, %3 : vector<112x196xf32>
    %6 = arith.truncf %5 : vector<112x196xf32> to vector<112x196xbf16>
    %c0_5 = arith.constant 0 : index
    %c0_6 = arith.constant 0 : index
    %7 = vector.load %arg4[%c0_5, %c0_6] : memref<336x112xbf16, #tpu.memory_space<vmem>>, vector<336x112xbf16>
    %cst_7 = arith.constant dense<0.000000e+00> : vector<336x196xf32>
    %8 = tpu.matmul %7, %6, %cst_7 {dimension_numbers = #tpu.dot_dimension_numbers<[1], [0], [0], [1], [0, 0, 1, 1], [], []>} : vector<336x112xbf16>, vector<112x196xbf16>, vector<336x196xf32> -> vector<336x196xf32>
    %c0_8 = arith.constant 0 : index
    %c0_9 = arith.constant 0 : index
    %9 = vector.load %arg5[%c0_8, %c0_9] : memref<336x1xf32, #tpu.memory_space<vmem>>, vector<336x1xf32>
    %10 = vector.broadcast %9 : vector<336x1xf32> to vector<336x196xf32>
    %11 = arith.addf %8, %10 : vector<336x196xf32>
    %c0_10 = arith.constant 0 : index
    %c0_11 = arith.constant 0 : index
    %12 = vector.load %arg6[%c0_10, %c0_11] : memref<336x196xf32, #tpu.memory_space<vmem>>, vector<336x196xf32>
    tpu.vector_store %arg6[%c0_10, %c0_11], %11 {strides = array<i32>} : memref<336x196xf32, #tpu.memory_space<vmem>>, vector<336x196xf32>,
    return
  }
  func.func @transform_0(%arg0: i32) -> (i32, i32) {
    %c0_i32 = arith.constant 0 : i32
    %c0_i32_0 = arith.constant 0 : i32
    %c0_i32_1 = arith.constant 0 : i32
    return %c0_i32, %c0_i32_0 : i32, i32
  }
  func.func @transform_1(%arg0: i32) -> (i32, i32) {
    %c0_i32 = arith.constant 0 : i32
    %c0_i32_0 = arith.constant 0 : i32
    %c0_i32_1 = arith.constant 0 : i32
    return %c0_i32, %c0_i32_0 : i32, i32
  }
  func.func @transform_2(%arg0: i32) -> (i32, i32) {
    %c0_i32 = arith.constant 0 : i32
    %c0_i32_0 = arith.constant 0 : i32
    %c0_i32_1 = arith.constant 0 : i32
    return %c0_i32, %c0_i32_0 : i32, i32
  }
  func.func @transform_3(%arg0: i32) -> (i32, i32) {
    %c0_i32 = arith.constant 0 : i32
    %c0_i32_0 = arith.constant 0 : i32
    return %arg0, %c0_i32 : i32, i32
  }
  func.func @transform_4(%arg0: i32) -> (i32, i32) {
    %c0_i32 = arith.constant 0 : i32
    %c0_i32_0 = arith.constant 0 : i32
    return %arg0, %c0_i32 : i32, i32
  }
  func.func @transform_5(%arg0: i32) -> (i32, i32) {
    %c0_i32 = arith.constant 0 : i32
    %c0_i32_0 = arith.constant 0 : i32
    return %arg0, %c0_i32 : i32, i32
  }
}

</mosaic_0001>

<llo_original>
// kernel: tpu_custom_call.1
$region0: #{tpu_custom_call.1}
  #allocation0 [shape = 'u32[]', space=smem, size = 0x4, offset = 0x4, fixed_abs, tag = 'smem constant byte address 0x4 - core index']
  #allocation1 [shape = 'u32[144,128]{1,0:T(1,128)}', space=vmem, size = 0x12000, scoped, tag = 'internal scratch']
  %s0 = inlined_call_operand.vmem [shape: f32[480,196], index: 0, kind: input, shape index: {}]
  %s1 = inlined_call_operand.vmem [shape: f32[112,196], index: 1, kind: input, shape index: {}]
  %s2 = inlined_call_operand.vmem [shape: bf16[112,480], index: 2, kind: input, shape index: {}]
  %s3 = inlined_call_operand.vmem [shape: bf16[672,112], index: 3, kind: input, shape index: {}]
  %s4 = inlined_call_operand.vmem [shape: f32[672,1], index: 4, kind: input, shape index: {}]
  %s5 = inlined_call_operand.vmem [shape: f32[672,196], index: 5, kind: output, shape index: {}]
  %s6 = sld [smem:[#allocation0]]
  $region53: #{tpu_custom_call.1} parent=0
    _
  %s8 = ssub.s32 1, %s6
  %s9 = scalar_select 0, %s8, %s6
  loop: start=0, step=1, limit=4
  $region2: #{tpu_custom_call.1} parent=0 // loop_pre_header
    _
  $region3: #{tpu_custom_call.1} parent=0 // loop_header
    %s11 = sphi 0, %s15
    %p12 = scmp.ge.s32.totalorder %s11, 4
    %s19 = sphi 0, %s19
    %s21 = sphi 0, %s19
    %s22 = sphi 0, %s21
    %s36 = sphi 0, %s22
    %s40 = sphi 0, %s40
    %s42 = sphi 0, %s40
    %s43 = sphi 0, %s42
    %s57 = sphi 0, %s43
    %s61 = sphi 0, %s61
    %s63 = sphi 0, %s61
    %s64 = sphi 0, %s63
    %s78 = sphi 0, %s64
    %s84 = sphi 0, %s86
    %s87 = sphi 0, %s84
    %s88 = sphi 0, %s87
    %s104 = sphi 0, %s88
    %s110 = sphi 0, %s112
    %s113 = sphi 0, %s110
    %s114 = sphi 0, %s113
    %s130 = sphi 0, %s114
    %s136 = sphi 0, %s138
    %s139 = sphi 0, %s136
    %s140 = sphi 0, %s139
    %s156 = sphi 0, %s140
  $region4: #{tpu_custom_call.1} parent=0 // loop_header_branch
    %14 = sbr.rel (%p12) target = $region8
  $region5: #{tpu_custom_call.1} parent=0 // loop_body
    %s16 = ssub.s32 %s11, 1
    %s17 = ssub.s32 %s11, 2
    %s18 = sadd.s32 %s11, 1
    %s20 = sadd.s32 %s19, 1
    %p23 = scmp.eq.s32.totalorder %s11, 1
    %p24 = scmp.ne.s32.totalorder %s19, %s21
    %p25 = scmp.eq.s32.totalorder %s11, 0
    %p26 = por %p24, %p25
    %p27 = scmp.ne.s32.totalorder %s19, %s21
    %p28 = scmp.eq.s32.totalorder %s16, 1
    %p29 = por %p27, %p28
    %p30 = scmp.ne.s32.totalorder %s21, %s22
    %p31 = scmp.eq.s32.totalorder %s16, 0
    %p32 = por %p30, %p31
    %p33 = scmp.ne.s32.totalorder %s21, %s22
    %p34 = scmp.eq.s32.totalorder %s17, 1
    %p35 = por %p33, %p34
    %p37 = scmp.ne.s32.totalorder %s22, %s36
    %p38 = scmp.eq.s32.totalorder %s17, 0
    %p39 = por %p37, %p38
    %s41 = sadd.s32 %s40, 1
    %p44 = scmp.eq.s32.totalorder %s11, 1
    %p45 = scmp.ne.s32.totalorder %s40, %s42
    %p46 = scmp.eq.s32.totalorder %s11, 0
    %p47 = por %p45, %p46
    %p48 = scmp.ne.s32.totalorder %s40, %s42
    %p49 = scmp.eq.s32.totalorder %s16, 1
    %p50 = por %p48, %p49
    %p51 = scmp.ne.s32.totalorder %s42, %s43
    %p52 = scmp.eq.s32.totalorder %s16, 0
    %p53 = por %p51, %p52
    %p54 = scmp.ne.s32.totalorder %s42, %s43
    %p55 = scmp.eq.s32.totalorder %s17, 1
    %p56 = por %p54, %p55
    %p58 = scmp.ne.s32.totalorder %s43, %s57
    %p59 = scmp.eq.s32.totalorder %s17, 0
    %p60 = por %p58, %p59
    %s62 = sadd.s32 %s61, 1
    %p65 = scmp.eq.s32.totalorder %s11, 1
    %p66 = scmp.ne.s32.totalorder %s61, %s63
    %p67 = scmp.eq.s32.totalorder %s11, 0
    %p68 = por %p66, %p67
    %p69 = scmp.ne.s32.totalorder %s61, %s63
    %p70 = scmp.eq.s32.totalorder %s16, 1
    %p71 = por %p69, %p70
    %p72 = scmp.ne.s32.totalorder %s63, %s64
    %p73 = scmp.eq.s32.totalorder %s16, 0
    %p74 = por %p72, %p73
    %p75 = scmp.ne.s32.totalorder %s63, %s64
    %p76 = scmp.eq.s32.totalorder %s17, 1
    %p77 = por %p75, %p76
    %p79 = scmp.ne.s32.totalorder %s64, %s78
    %p80 = scmp.eq.s32.totalorder %s17, 0
    %p81 = por %p79, %p80
    %s82 = ssub.s32 %s11, %s18
    %p83 = scmp.eq.s32.totalorder %s82, 0
    %s85 = sadd.s32 %s84, 1
    %s86 = scalar_select %p83, %s84, %s85
    %p89 = pneg %p83
    %p90 = scmp.eq.s32.totalorder %s11, 1
    %p91 = por %p89, %p90
    %p92 = scmp.ne.s32.totalorder %s84, %s87
    %p93 = scmp.eq.s32.totalorder %s11, 0
    %p94 = por %p92, %p93
    %p95 = scmp.ne.s32.totalorder %s84, %s87
    %p96 = scmp.eq.s32.totalorder %s16, 1
    %p97 = por %p95, %p96
    %p98 = scmp.ne.s32.totalorder %s87, %s88
    %p99 = scmp.eq.s32.totalorder %s16, 0
    %p100 = por %p98, %p99
    %p101 = scmp.ne.s32.totalorder %s87, %s88
    %p102 = scmp.eq.s32.totalorder %s17, 1
    %p103 = por %p101, %p102
    %p105 = scmp.ne.s32.totalorder %s88, %s104
    %p106 = scmp.eq.s32.totalorder %s17, 0
    %p107 = por %p105, %p106
    %s108 = ssub.s32 %s11, %s18
    %p109 = scmp.eq.s32.totalorder %s108, 0
    %s111 = sadd.s32 %s110, 1
    %s112 = scalar_select %p109, %s110, %s111
    %p115 = pneg %p109
    %p116 = scmp.eq.s32.totalorder %s11, 1
    %p117 = por %p115, %p116
    %p118 = scmp.ne.s32.totalorder %s110, %s113
    %p119 = scmp.eq.s32.totalorder %s11, 0
    %p120 = por %p118, %p119
    %p121 = scmp.ne.s32.totalorder %s110, %s113
    %p122 = scmp.eq.s32.totalorder %s16, 1
    %p123 = por %p121, %p122
    %p124 = scmp.ne.s32.totalorder %s113, %s114
    %p125 = scmp.eq.s32.totalorder %s16, 0
    %p126 = por %p124, %p125
    %p127 = scmp.ne.s32.totalorder %s113, %s114
    %p128 = scmp.eq.s32.totalorder %s17, 1
    %p129 = por %p127, %p128
    %p131 = scmp.ne.s32.totalorder %s114, %s130
    %p132 = scmp.eq.s32.totalorder %s17, 0
    %p133 = por %p131, %p132
    %s134 = ssub.s32 %s11, %s18
    %p135 = scmp.eq.s32.totalorder %s134, 0
    %s137 = sadd.s32 %s136, 1
    %s138 = scalar_select %p135, %s136, %s137
    %p141 = pneg %p135
    %p142 = scmp.eq.s32.totalorder %s11, 1
    %p143 = por %p141, %p142
    %p144 = scmp.ne.s32.totalorder %s136, %s139
    %p145 = scmp.eq.s32.totalorder %s11, 0
    %p146 = por %p144, %p145
    %p147 = scmp.ne.s32.totalorder %s136, %s139
    %p148 = scmp.eq.s32.totalorder %s16, 1
    %p149 = por %p147, %p148
    %p150 = scmp.ne.s32.totalorder %s139, %s140
    %p151 = scmp.eq.s32.totalorder %s16, 0
    %p152 = por %p150, %p151
    %p153 = scmp.ne.s32.totalorder %s139, %s140
    %p154 = scmp.eq.s32.totalorder %s17, 1
    %p155 = por %p153, %p154
    %p157 = scmp.ne.s32.totalorder %s140, %s156
    %p158 = scmp.eq.s32.totalorder %s17, 0
    %p159 = por %p157, %p158
    %p160 = scmp.le.s32.totalorder 1, %s11
    %p161 = scmp.lt.s32.totalorder %s11, 3
    %p162 = pnand %p160, %p161
    %p163 = pneg %p162
    // Predicated region
    $region9: #{tpu_custom_call.1} parent=5 // pred_check
      _
    $region10: #{tpu_custom_call.1} parent=5 // pred_check_branch
      %165 = sbr.rel (%p162) target = $region12
    $region11: #{tpu_custom_call.1} parent=5 // pred_region
      %s166 = ssub.s32 %s11, 1
      // Predicated region
      $region13: #{tpu_custom_call.1} parent=11 // pred_check
        %p167 = pneg %p32
      $region14: #{tpu_custom_call.1} parent=11 // pred_check_branch
        %169 = sbr.rel (%p167) target = $region16
      $region15: #{tpu_custom_call.1} parent=11 // pred_region
        _
      $region16: #{tpu_custom_call.1} parent=11 // pred_fallthru
        _
      // Predicated region
      $region17: #{tpu_custom_call.1} parent=11 // pred_check
        %p170 = pneg %p53
      $region18: #{tpu_custom_call.1} parent=11 // pred_check_branch
        %172 = sbr.rel (%p170) target = $region20
      $region19: #{tpu_custom_call.1} parent=11 // pred_region
        _
      $region20: #{tpu_custom_call.1} parent=11 // pred_fallthru
        _
      // Predicated region
      $region21: #{tpu_custom_call.1} parent=11 // pred_check
        %p173 = pneg %p74
      $region22: #{tpu_custom_call.1} parent=11 // pred_check_branch
        %175 = sbr.rel (%p173) target = $region24
      $region23: #{tpu_custom_call.1} parent=11 // pred_region
        _
      $region24: #{tpu_custom_call.1} parent=11 // pred_fallthru
        _
    $region12: #{tpu_custom_call.1} parent=5 // pred_fallthru
      _
    %p176 = scmp.lt.s32.totalorder %s11, 2
    // Predicated region
    $region25: #{tpu_custom_call.1} parent=5 // pred_check
      %p177 = pneg %p176
    $region26: #{tpu_custom_call.1} parent=5 // pred_check_branch
      %179 = sbr.rel (%p177) target = $region28
    $region27: #{tpu_custom_call.1} parent=5 // pred_region
      // Predicated region
      $region29: #{tpu_custom_call.1} parent=27 // pred_check
        %p180 = pneg %p94
      $region30: #{tpu_custom_call.1} parent=27 // pred_check_branch
        %182 = sbr.rel (%p180) target = $region32
      $region31: #{tpu_custom_call.1} parent=27 // pred_region
        %s183 = smul.u32 42, %s11
        %p184 = scmp.lt.s32.totalorder %s183, 83
        %s185 = scalar_select %p184, %s183, 83
        %s186 = smul.addr %s185, 4
        %s187 = scalar_lea.vmem %s3, %s186
        %s188 = smul.u32 42, %s11
      $region32: #{tpu_custom_call.1} parent=27 // pred_fallthru
        _
      // Predicated region
      $region33: #{tpu_custom_call.1} parent=27 // pred_check
        %p189 = pneg %p120
      $region34: #{tpu_custom_call.1} parent=27 // pred_check_branch
        %191 = sbr.rel (%p189) target = $region36
      $region35: #{tpu_custom_call.1} parent=27 // pred_region
        %s192 = smul.u32 42, %s11
        %p193 = scmp.lt.s32.totalorder %s192, 83
        %s194 = scalar_select %p193, %s192, 83
        %s195 = smul.addr %s194, 8
        %s196 = scalar_lea.vmem %s4, %s195
        %s197 = smul.u32 42, %s11
      $region36: #{tpu_custom_call.1} parent=27 // pred_fallthru
        _
    $region28: #{tpu_custom_call.1} parent=5 // pred_fallthru
      _
    %p198 = scmp.le.s32.totalorder 1, %s11
    %p199 = scmp.lt.s32.totalorder %s11, 3
    %p200 = pnand %p198, %p199
    %p201 = pneg %p200
    // Predicated region
    $region37: #{tpu_custom_call.1} parent=5 // pred_check
      _
    $region38: #{tpu_custom_call.1} parent=5 // pred_check_branch
      %203 = sbr.rel (%p200) target = $region40
    $region39: #{tpu_custom_call.1} parent=5 // pred_region
      %s204 = ssub.s32 %s11, 1
      %p205 = pneg %p32
      %p206 = pneg %p29
      %p207 = pneg %p53
      %p208 = pneg %p50
      %p209 = pneg %p74
      %p210 = pneg %p71
      %s211 = smul.u32 42, %s16
      %p212 = scmp.lt.s32.totalorder %s211, 83
      %s213 = scalar_select %p212, %s211, 83
      %s214 = smul.addr %s213, 4
      %s215 = scalar_lea.vmem %s3, %s214
      %p216 = pneg %p100
      %p217 = pneg %p97
      %s218 = smul.u32 42, %s16
      %p219 = scmp.lt.s32.totalorder %s218, 83
      %s220 = scalar_select %p219, %s218, 83
      %s221 = smul.addr %s220, 8
      %s222 = scalar_lea.vmem %s4, %s221
      %p223 = pneg %p126
      %p224 = pneg %p123
      %p225 = pneg %p152
      %p226 = pneg %p149
      %s227 = smul.u32 42, %s16
      %p228 = scmp.lt.s32.totalorder %s227, 83
      %s229 = scalar_select %p228, %s227, 83
      %s230 = smul.addr %s229, 2
      %s231 = smul.addr %s230, 8
      %s232 = scalar_lea.vmem %s5, %s231
      %s233 = smul.u32 42, %s16
      %p234 = scmp.lt.s32.totalorder %s233, 83
      %s235 = scalar_select %p234, %s233, 83
      %s236 = smul.addr %s235, 4
      %s237 = scalar_lea.vmem %s3, %s236
      %s238 = smul.u32 42, %s16
      %s239 = smul.u32 42, %s16
      %p240 = scmp.lt.s32.totalorder %s239, 83
      %s241 = scalar_select %p240, %s239, 83
      %s242 = smul.addr %s241, 8
      %s243 = scalar_lea.vmem %s4, %s242
      %s244 = smul.u32 42, %s16
      %s245 = smul.u32 42, %s16
      %p246 = scmp.lt.s32.totalorder %s245, 83
      %s247 = scalar_select %p246, %s245, 83
      %s248 = smul.addr %s247, 2
      %s249 = smul.addr %s248, 8
      %s250 = scalar_lea.vmem %s5, %s249
      %s251 = smul.u32 42, %s16
      %v253 = vld [vmem:[%s2] sm:$0xff]
      %v254 = vld [vmem:[%s2 + $0x8] sm:$0xff]
      %v255 = vld [vmem:[%s2 + $0x10] sm:$0xff]
      %v256 = vld [vmem:[%s2 + $0x18] sm:$0xff]
      %v257 = vld [vmem:[%s2 + $0x20] sm:$0xff]
      %v258 = vld [vmem:[%s2 + $0x28] sm:$0xff]
      %v259 = vld [vmem:[%s2 + $0x30] sm:$0xff]
      %v260 = vld [vmem:[%s2 + $0x38] sm:$0xff]
      %v261 = vld [vmem:[%s2 + $0x40] sm:$0xff]
      %v262 = vld [vmem:[%s2 + $0x48] sm:$0xff]
      %v263 = vld [vmem:[%s2 + $0x50] sm:$0xff]
      %v264 = vld [vmem:[%s2 + $0x58] sm:$0xff]
      %v265 = vld [vmem:[%s2 + $0x60] sm:$0xff]
      %v266 = vld [vmem:[%s2 + $0x68] sm:$0xff]
      %v267 = vld [vmem:[%s2 + $0x70] sm:$0xff]
      %v268 = vld [vmem:[%s2 + $0x78] sm:$0xff]
      %v269 = vld [vmem:[%s2 + $0x80] sm:$0xff]
      %v270 = vld [vmem:[%s2 + $0x88] sm:$0xff]
      %v271 = vld [vmem:[%s2 + $0x90] sm:$0xff]
      %v272 = vld [vmem:[%s2 + $0x98] sm:$0xff]
      %v273 = vld [vmem:[%s2 + $0xa0] sm:$0xff]
      %v274 = vld [vmem:[%s2 + $0xa8] sm:$0xff]
      %v275 = vld [vmem:[%s2 + $0xb0] sm:$0xff]
      %v276 = vld [vmem:[%s2 + $0xb8] sm:$0xff]
      %v277 = vld [vmem:[%s2 + $0xc0] sm:$0xff]
      %v278 = vld [vmem:[%s2 + $0xc8] sm:$0xff]
      %v279 = vld [vmem:[%s2 + $0xd0] sm:$0xff]
      %v280 = vld [vmem:[%s2 + $0xd8] sm:$0xff]
      %v281 = vld [vmem:[%s0] sm:$0xff]
      %v282 = vld [vmem:[%s0 + $0x8] sm:$0xff]
      %v283 = vld [vmem:[%s0 + $0x10] sm:$0xff]
      %v284 = vld [vmem:[%s0 + $0x18] sm:$0xff]
      %v285 = vld [vmem:[%s0 + $0x20] sm:$0xff]
      %v286 = vld [vmem:[%s0 + $0x28] sm:$0xff]
      %v287 = vld [vmem:[%s0 + $0x30] sm:$0xff]
      %v288 = vld [vmem:[%s0 + $0x38] sm:$0xff]
      %v289 = vld [vmem:[%s0 + $0x40] sm:$0xff]
      %v290 = vld [vmem:[%s0 + $0x48] sm:$0xff]
      %v291 = vld [vmem:[%s0 + $0x50] sm:$0xff]
      %v292 = vld [vmem:[%s0 + $0x58] sm:$0xff]
      %v293 = vld [vmem:[%s0 + $0x60] sm:$0xff]
      %v294 = vld [vmem:[%s0 + $0x68] sm:$0xff]
      %v295 = vld [vmem:[%s0 + $0x70] sm:$0xff]
      %v296 = vld [vmem:[%s0 + $0x78] sm:$0xff]
      %v297 = vld [vmem:[%s0 + $0x80] sm:$0xff]
      %v298 = vld [vmem:[%s0 + $0x88] sm:$0xff]
      %v299 = vld [vmem:[%s0 + $0x90] sm:$0xff]
      %v300 = vld [vmem:[%s0 + $0x98] sm:$0xff]
      %v301 = vld [vmem:[%s0 + $0xa0] sm:$0xff]
      %v302 = vld [vmem:[%s0 + $0xa8] sm:$0xff]
      %v303 = vld [vmem:[%s0 + $0xb0] sm:$0xff]
      %v304 = vld [vmem:[%s0 + $0xb8] sm:$0xff]
      %v305 = vld [vmem:[%s0 + $0xc0] sm:$0xff]
      %v306 = vld [vmem:[%s0 + $0xc8] sm:$0xff]
      %v307 = vld [vmem:[%s0 + $0xd0] sm:$0xff]
      %v308 = vld [vmem:[%s0 + $0xd8] sm:$0xff]
      %v309 = vld [vmem:[%s0 + $0xe0] sm:$0xff]
      %v310 = vld [vmem:[%s0 + $0xe8] sm:$0xff]
      %v311 = vld [vmem:[%s0 + $0xf0] sm:$0xff]
      %v312 = vld [vmem:[%s0 + $0xf8] sm:$0xff]
      %v313 = vld [vmem:[%s0 + $0x100] sm:$0xff]
      %v314 = vld [vmem:[%s0 + $0x108] sm:$0xff]
      %v315 = vld [vmem:[%s0 + $0x110] sm:$0xff]
      %v316 = vld [vmem:[%s0 + $0x118] sm:$0xff]
      %v317 = vld [vmem:[%s0 + $0x120] sm:$0xff]
      %v318 = vld [vmem:[%s0 + $0x128] sm:$0xff]
      %v319 = vld [vmem:[%s0 + $0x130] sm:$0xff]
      %v320 = vld [vmem:[%s0 + $0x138] sm:$0xff]
      %v321 = vld [vmem:[%s0 + $0x140] sm:$0xff]
      %v322 = vld [vmem:[%s0 + $0x148] sm:$0xff]
      %v323 = vld [vmem:[%s0 + $0x150] sm:$0xff]
      %v324 = vld [vmem:[%s0 + $0x158] sm:$0xff]
      %v325 = vld [vmem:[%s0 + $0x160] sm:$0xff]
      %v326 = vld [vmem:[%s0 + $0x168] sm:$0xff]
      %v327 = vld [vmem:[%s0 + $0x170] sm:$0xff]
      %v328 = vld [vmem:[%s0 + $0x178] sm:$0xff]
      %v329 = vld [vmem:[%s0 + $0x180] sm:$0xff]
      %v330 = vld [vmem:[%s0 + $0x188] sm:$0xff]
      %v331 = vld [vmem:[%s0 + $0x190] sm:$0xff]
      %v332 = vld [vmem:[%s0 + $0x198] sm:$0xff]
      %v333 = vld [vmem:[%s0 + $0x1a0] sm:$0xff]
      %v334 = vld [vmem:[%s0 + $0x1a8] sm:$0xff]
      %v335 = vld [vmem:[%s0 + $0x1b0] sm:$0xff]
      %v336 = vld [vmem:[%s0 + $0x1b8] sm:$0xff]
      %v337 = vld [vmem:[%s0 + $0x1c0] sm:$0xff]
      %v338 = vld [vmem:[%s0 + $0x1c8] sm:$0xff]
      %v339 = vld [vmem:[%s0 + $0x1d0] sm:$0xff]
      %v340 = vld [vmem:[%s0 + $0x1d8] sm:$0xff]
      %v341 = vld [vmem:[%s0 + $0x1e0] sm:$0xff]
      %v342 = vld [vmem:[%s0 + $0x1e8] sm:$0xff]
      %v343 = vld [vmem:[%s0 + $0x1f0] sm:$0xff]
      %v344 = vld [vmem:[%s0 + $0x1f8] sm:$0xff]
      %v345 = vld [vmem:[%s0 + $0x200] sm:$0xff]
      %v346 = vld [vmem:[%s0 + $0x208] sm:$0xff]
      %v347 = vld [vmem:[%s0 + $0x210] sm:$0xff]
      %v348 = vld [vmem:[%s0 + $0x218] sm:$0xff]
      %v349 = vld [vmem:[%s0 + $0x220] sm:$0xff]
      %v350 = vld [vmem:[%s0 + $0x228] sm:$0xff]
      %v351 = vld [vmem:[%s0 + $0x230] sm:$0xff]
      %v352 = vld [vmem:[%s0 + $0x238] sm:$0xff]
      %v353 = vld [vmem:[%s0 + $0x240] sm:$0xff]
      %v354 = vld [vmem:[%s0 + $0x248] sm:$0xff]
      %v355 = vld [vmem:[%s0 + $0x250] sm:$0xff]
      %v356 = vld [vmem:[%s0 + $0x258] sm:$0xff]
      %v357 = vld [vmem:[%s0 + $0x260] sm:$0xff]
      %v358 = vld [vmem:[%s0 + $0x268] sm:$0xff]
      %v359 = vld [vmem:[%s0 + $0x270] sm:$0xff]
      %v360 = vld [vmem:[%s0 + $0x278] sm:$0xff]
      %v361 = vld [vmem:[%s0 + $0x280] sm:$0xff]
      %v362 = vld [vmem:[%s0 + $0x288] sm:$0xff]
      %v363 = vld [vmem:[%s0 + $0x290] sm:$0xff]
      %v364 = vld [vmem:[%s0 + $0x298] sm:$0xff]
      %v365 = vld [vmem:[%s0 + $0x2a0] sm:$0xff]
      %v366 = vld [vmem:[%s0 + $0x2a8] sm:$0xff]
      %v367 = vld [vmem:[%s0 + $0x2b0] sm:$0xff]
      %v368 = vld [vmem:[%s0 + $0x2b8] sm:$0xff]
      %v369 = vld [vmem:[%s0 + $0x2c0] sm:$0xff]
      %v370 = vld [vmem:[%s0 + $0x2c8] sm:$0xff]
      %v371 = vld [vmem:[%s0 + $0x2d0] sm:$0xff]
      %v372 = vld [vmem:[%s0 + $0x2d8] sm:$0xff]
      %v373 = vld [vmem:[%s0 + $0x2e0] sm:$0xff]
      %v374 = vld [vmem:[%s0 + $0x2e8] sm:$0xff]
      %v375 = vld [vmem:[%s0 + $0x2f0] sm:$0xff]
      %v376 = vld [vmem:[%s0 + $0x2f8] sm:$0xff]
      %v377 = vld [vmem:[%s0 + $0x300] sm:$0xff]
      %v378 = vld [vmem:[%s0 + $0x308] sm:$0xff]
      %v379 = vld [vmem:[%s0 + $0x310] sm:$0xff]
      %v380 = vld [vmem:[%s0 + $0x318] sm:$0xff]
      %v381 = vld [vmem:[%s0 + $0x320] sm:$0xff]
      %v382 = vld [vmem:[%s0 + $0x328] sm:$0xff]
      %v383 = vld [vmem:[%s0 + $0x330] sm:$0xff]
      %v384 = vld [vmem:[%s0 + $0x338] sm:$0xff]
      %v385 = vld [vmem:[%s0 + $0x340] sm:$0xff]
      %v386 = vld [vmem:[%s0 + $0x348] sm:$0xff]
      %v387 = vld [vmem:[%s0 + $0x350] sm:$0xff]
      %v388 = vld [vmem:[%s0 + $0x358] sm:$0xff]
      %v389 = vld [vmem:[%s0 + $0x360] sm:$0xff]
      %v390 = vld [vmem:[%s0 + $0x368] sm:$0xff]
      %v391 = vld [vmem:[%s0 + $0x370] sm:$0xff]
      %v392 = vld [vmem:[%s0 + $0x378] sm:$0xff]
      %v393 = vld [vmem:[%s0 + $0x380] sm:$0xff]
      %v394 = vld [vmem:[%s0 + $0x388] sm:$0xff]
      %v395 = vld [vmem:[%s0 + $0x390] sm:$0xff]
      %v396 = vld [vmem:[%s0 + $0x398] sm:$0xff]
      %v397 = vld [vmem:[%s0 + $0x3a0] sm:$0xff]
      %v398 = vld [vmem:[%s0 + $0x3a8] sm:$0xff]
      %v399 = vld [vmem:[%s0 + $0x3b0] sm:$0xff]
      %v400 = vld [vmem:[%s0 + $0x3b8] sm:$0xff]
      %v401 = vpack.c.bf16 %v283, %v281
      %v402 = vpack.c.bf16 %v284, %v282
      %v403 = vpack.c.bf16 %v287, %v285
      %v404 = vpack.c.bf16 %v288, %v286
      %v405 = vpack.c.bf16 %v291, %v289
      %v406 = vpack.c.bf16 %v292, %v290
      %v407 = vpack.c.bf16 %v295, %v293
      %v408 = vpack.c.bf16 %v296, %v294
      %v409 = vpack.c.bf16 %v299, %v297
      %v410 = vpack.c.bf16 %v300, %v298
      %v411 = vpack.c.bf16 %v303, %v301
      %v412 = vpack.c.bf16 %v304, %v302
      %v413 = vpack.c.bf16 %v307, %v305
      %v414 = vpack.c.bf16 %v308, %v306
      %v415 = vpack.c.bf16 %v311, %v309
      %v416 = vpack.c.bf16 %v312, %v310
      %v417 = vpack.c.bf16 %v315, %v313
      %v418 = vpack.c.bf16 %v316, %v314
      %v419 = vpack.c.bf16 %v319, %v317
      %v420 = vpack.c.bf16 %v320, %v318
      %v421 = vpack.c.bf16 %v323, %v321
      %v422 = vpack.c.bf16 %v324, %v322
      %v423 = vpack.c.bf16 %v327, %v325
      %v424 = vpack.c.bf16 %v328, %v326
      %v425 = vpack.c.bf16 %v331, %v329
      %v426 = vpack.c.bf16 %v332, %v330
      %v427 = vpack.c.bf16 %v335, %v333
      %v428 = vpack.c.bf16 %v336, %v334
      %v429 = vpack.c.bf16 %v339, %v337
      %v430 = vpack.c.bf16 %v340, %v338
      %v431 = vpack.c.bf16 %v343, %v341
      %v432 = vpack.c.bf16 %v344, %v342
      %v433 = vpack.c.bf16 %v347, %v345
      %v434 = vpack.c.bf16 %v348, %v346
      %v435 = vpack.c.bf16 %v351, %v349
      %v436 = vpack.c.bf16 %v352, %v350
      %v437 = vpack.c.bf16 %v355, %v353
      %v438 = vpack.c.bf16 %v356, %v354
      %v439 = vpack.c.bf16 %v359, %v357
      %v440 = vpack.c.bf16 %v360, %v358
      %v441 = vpack.c.bf16 %v363, %v361
      %v442 = vpack.c.bf16 %v364, %v362
      %v443 = vpack.c.bf16 %v367, %v365
      %v444 = vpack.c.bf16 %v368, %v366
      %v445 = vpack.c.bf16 %v371, %v369
      %v446 = vpack.c.bf16 %v372, %v370
      %v447 = vpack.c.bf16 %v375, %v373
      %v448 = vpack.c.bf16 %v376, %v374
      %v449 = vpack.c.bf16 %v379, %v377
      %v450 = vpack.c.bf16 %v380, %v378
      %v451 = vpack.c.bf16 %v383, %v381
      %v452 = vpack.c.bf16 %v384, %v382
      %v453 = vpack.c.bf16 %v387, %v385
      %v454 = vpack.c.bf16 %v388, %v386
      %v455 = vpack.c.bf16 %v391, %v389
      %v456 = vpack.c.bf16 %v392, %v390
      %v457 = vpack.c.bf16 %v395, %v393
      %v458 = vpack.c.bf16 %v396, %v394
      %v459 = vpack.c.bf16 %v399, %v397
      %v460 = vpack.c.bf16 %v400, %v398
      %v489 = vunpack.c.l.b16 %v253
      %v490 = vunpack.c.h.b16 %v253
      %v491 = vunpack.c.l.b16 %v254
      %v492 = vunpack.c.h.b16 %v254
      %v493 = vunpack.c.l.b16 %v255
      %v494 = vunpack.c.h.b16 %v255
      %v495 = vunpack.c.l.b16 %v256
      %v496 = vunpack.c.h.b16 %v256
      %v497 = vunpack.c.l.b16 %v257
      %v498 = vunpack.c.h.b16 %v257
      %v499 = vunpack.c.l.b16 %v258
      %v500 = vunpack.c.h.b16 %v258
      %v501 = vunpack.c.l.b16 %v259
      %v502 = vunpack.c.h.b16 %v259
      %v503 = vunpack.c.l.b16 %v260
      %v504 = vunpack.c.h.b16 %v260
      %v505 = vunpack.c.l.b16 %v261
      %v506 = vunpack.c.h.b16 %v261
      %v507 = vunpack.c.l.b16 %v262
      %v508 = vunpack.c.h.b16 %v262
      %v509 = vunpack.c.l.b16 %v263
      %v510 = vunpack.c.h.b16 %v263
      %v511 = vunpack.c.l.b16 %v264
      %v512 = vunpack.c.h.b16 %v264
      %v513 = vunpack.c.l.b16 %v265
      %v514 = vunpack.c.h.b16 %v265
      %v515 = vunpack.c.l.b16 %v266
      %v516 = vunpack.c.h.b16 %v266
      %v517 = vunpack.c.l.b16 %v267
      %v518 = vunpack.c.h.b16 %v267
      %v519 = vunpack.c.l.b16 %v268
      %v520 = vunpack.c.h.b16 %v268
      %v521 = vunpack.c.l.b16 %v269
      %v522 = vunpack.c.h.b16 %v269
      %v523 = vunpack.c.l.b16 %v270
      %v524 = vunpack.c.h.b16 %v270
      %v525 = vunpack.c.l.b16 %v271
      %v526 = vunpack.c.h.b16 %v271
      %v527 = vunpack.c.l.b16 %v272
      %v528 = vunpack.c.h.b16 %v272
      %v529 = vunpack.c.l.b16 %v273
      %v530 = vunpack.c.h.b16 %v273
      %v531 = vunpack.c.l.b16 %v274
      %v532 = vunpack.c.h.b16 %v274
      %v533 = vunpack.c.l.b16 %v275
      %v534 = vunpack.c.h.b16 %v275
      %v535 = vunpack.c.l.b16 %v276
      %v536 = vunpack.c.h.b16 %v276
      %v537 = vunpack.c.l.b16 %v277
      %v538 = vunpack.c.h.b16 %v277
      %v539 = vunpack.c.l.b16 %v278
      %v540 = vunpack.c.h.b16 %v278
      %v541 = vunpack.c.l.b16 %v279
      %v542 = vunpack.c.h.b16 %v279
      %v543 = vunpack.c.l.b16 %v280
      %v544 = vunpack.c.h.b16 %v280
      %v545 = vpack.c.b16 %v493, %v489
      %v546 = vpack.c.b16 %v494, %v490
      %v547 = vpack.c.b16 %v495, %v491
      %v548 = vpack.c.b16 %v496, %v492
      %v549 = vpack.c.b16 %v501, %v497
      %v550 = vpack.c.b16 %v502, %v498
      %v551 = vpack.c.b16 %v503, %v499
      %v552 = vpack.c.b16 %v504, %v500
      %v553 = vpack.c.b16 %v509, %v505
      %v554 = vpack.c.b16 %v510, %v506
      %v555 = vpack.c.b16 %v511, %v507
      %v556 = vpack.c.b16 %v512, %v508
      %v557 = vpack.c.b16 %v517, %v513
      %v558 = vpack.c.b16 %v518, %v514
      %v559 = vpack.c.b16 %v519, %v515
      %v560 = vpack.c.b16 %v520, %v516
      %v561 = vpack.c.b16 %v525, %v521
      %v562 = vpack.c.b16 %v526, %v522
      %v563 = vpack.c.b16 %v527, %v523
      %v564 = vpack.c.b16 %v528, %v524
      %v565 = vpack.c.b16 %v533, %v529
      %v566 = vpack.c.b16 %v534, %v530
      %v567 = vpack.c.b16 %v535, %v531
      %v568 = vpack.c.b16 %v536, %v532
      %v569 = vpack.c.b16 %v541, %v537
      %v570 = vpack.c.b16 %v542, %v538
      %v571 = vpack.c.b16 %v543, %v539
      %v572 = vpack.c.b16 %v544, %v540
      %vm594 = vcmask 785408
      %v596 = vsel %vm594, %v548, 0
      %v599 = vsel %vm594, %v552, 0
      %v602 = vsel %vm594, %v556, 0
      %v605 = vsel %vm594, %v560, 0
      %v608 = vsel %vm594, %v564, 0
      %v611 = vsel %vm594, %v568, 0
      %v614 = vsel %vm594, %v572, 0
      %616 = vmatprep.subr.bf16.mxu0 %v402
      %617 = vmatpush1.bf16.msra.mxu0 %v401
      %618 = vmatprep.subr.bf16.mxu0 %v404
      %619 = vmatpush1.bf16.msra.mxu0 %v403
      %620 = vmatprep.subr.bf16.mxu0 %v406
      %621 = vmatpush1.bf16.msra.mxu0 %v405
      %622 = vmatprep.subr.bf16.mxu0 %v408
      %623 = vmatpush1.bf16.msra.mxu0 %v407
      %624 = vmatprep.subr.bf16.mxu0 %v410
      %625 = vmatpush1.bf16.msra.mxu0 %v409
      %626 = vmatprep.subr.bf16.mxu0 %v412
      %627 = vmatpush1.bf16.msra.mxu0 %v411
      %628 = vmatprep.subr.bf16.mxu0 %v414
      %629 = vmatpush1.bf16.msra.mxu0 %v413
      %630 = vmatprep.subr.bf16.mxu0 %v416
      %631 = vmatpush1.bf16.msra.mxu0 %v415
      %632 = vmatprep.subr.bf16.mxu0 %v418
      %633 = vmatpush1.bf16.msra.mxu0 %v417
      %634 = vmatprep.subr.bf16.mxu0 %v420
      %635 = vmatpush1.bf16.msra.mxu0 %v419
      %636 = vmatprep.subr.bf16.mxu0 %v422
      %637 = vmatpush1.bf16.msra.mxu0 %v421
      %638 = vmatprep.subr.bf16.mxu0 %v424
      %639 = vmatpush1.bf16.msra.mxu0 %v423
      %640 = vmatprep.subr.bf16.mxu0 %v426
      %641 = vmatpush1.bf16.msra.mxu0 %v425
      %642 = vmatprep.subr.bf16.mxu0 %v428
      %643 = vmatpush1.bf16.msra.mxu0 %v427
      %644 = vmatprep.subr.bf16.mxu0 %v430
      %645 = vmatpush1.bf16.msra.mxu0 %v429
      %646 = vmatprep.subr.bf16.mxu0 %v432
      %647 = vmatpush1.bf16.msra.mxu0 %v431
      %648 = vmatprep.mubr.bf16.mxu0 %v546
      %649 = vmatmul.mubr.bf16.gmra.mrb[0].mxu0 %v545
      %v650 = vpop.f32.mrb[0].mxu0
      %v651 = vadd.f32 0.0, %v650
      %v652 = vpop.f32.mrb[0].mxu0
      %v653 = vadd.f32 0.0, %v652
      %v654 = vpop.f32.mrb[0].mxu0
      %v655 = vadd.f32 0.0, %v654
      %v656 = vpop.f32.mrb[0].mxu0
      %v657 = vadd.f32 0.0, %v656
      %658 = vmatprep.mubr.bf16.mxu0 %v550
      %659 = vmatmul.mubr.bf16.gmra.mrb[0].mxu0 %v549
      %v660 = vpop.f32.mrb[0].mxu0
      %v661 = vadd.f32 0.0, %v660
      %v662 = vpop.f32.mrb[0].mxu0
      %v663 = vadd.f32 0.0, %v662
      %v664 = vpop.f32.mrb[0].mxu0
      %v665 = vadd.f32 0.0, %v664
      %v666 = vpop.f32.mrb[0].mxu0
      %v667 = vadd.f32 0.0, %v666
      %668 = vmatprep.mubr.bf16.mxu0 %v554
      %669 = vmatmul.mubr.bf16.gmra.mrb[0].mxu0 %v553
      %v670 = vpop.f32.mrb[0].mxu0
      %v671 = vadd.f32 0.0, %v670
      %v672 = vpop.f32.mrb[0].mxu0
      %v673 = vadd.f32 0.0, %v672
      %v674 = vpop.f32.mrb[0].mxu0
      %v675 = vadd.f32 0.0, %v674
      %v676 = vpop.f32.mrb[0].mxu0
      %v677 = vadd.f32 0.0, %v676
      %678 = vmatprep.mubr.bf16.mxu0 %v558
      %679 = vmatmul.mubr.bf16.gmra.mrb[0].mxu0 %v557
      %v680 = vpop.f32.mrb[0].mxu0
      %v681 = vadd.f32 0.0, %v680
      %v682 = vpop.f32.mrb[0].mxu0
      %v683 = vadd.f32 0.0, %v682
      %v684 = vpop.f32.mrb[0].mxu0
      %v685 = vadd.f32 0.0, %v684
      %v686 = vpop.f32.mrb[0].mxu0
      %v687 = vadd.f32 0.0, %v686
      %688 = vmatprep.mubr.bf16.mxu0 %v562
      %689 = vmatmul.mubr.bf16.gmra.mrb[0].mxu0 %v561
      %v690 = vpop.f32.mrb[0].mxu0
      %v691 = vadd.f32 0.0, %v690
      %v692 = vpop.f32.mrb[0].mxu0
      %v693 = vadd.f32 0.0, %v692
      %v694 = vpop.f32.mrb[0].mxu0
      %v695 = vadd.f32 0.0, %v694
      %v696 = vpop.f32.mrb[0].mxu0
      %v697 = vadd.f32 0.0, %v696
      %698 = vmatprep.mubr.bf16.mxu0 %v566
      %699 = vmatmul.mubr.bf16.gmra.mrb[0].mxu0 %v565
      %v700 = vpop.f32.mrb[0].mxu0
      %v701 = vadd.f32 0.0, %v700
      %v702 = vpop.f32.mrb[0].mxu0
      %v703 = vadd.f32 0.0, %v702
      %v704 = vpop.f32.mrb[0].mxu0
      %v705 = vadd.f32 0.0, %v704
      %v706 = vpop.f32.mrb[0].mxu0
      %v707 = vadd.f32 0.0, %v706
      %708 = vmatprep.mubr.bf16.mxu0 %v570
      %709 = vmatmul.mubr.bf16.gmra.mrb[0].mxu0 %v569
      %v710 = vpop.f32.mrb[0].mxu0
      %v711 = vadd.f32 0.0, %v710
      %v712 = vpop.f32.mrb[0].mxu0
      %v713 = vadd.f32 0.0, %v712
      %v714 = vpop.f32.mrb[0].mxu0
      %v715 = vadd.f32 0.0, %v714
      %v716 = vpop.f32.mrb[0].mxu0
      %v717 = vadd.f32 0.0, %v716
      %718 = vdwg.mxu0
      %719 = vmatprep.subr.bf16.mxu0 %v434
      %720 = vmatpush1.bf16.msra.mxu0 %v433
      %721 = vmatprep.subr.bf16.mxu0 %v436
      %722 = vmatpush1.bf16.msra.mxu0 %v435
      %723 = vmatprep.subr.bf16.mxu0 %v438
      %724 = vmatpush1.bf16.msra.mxu0 %v437
      %725 = vmatprep.subr.bf16.mxu0 %v440
      %726 = vmatpush1.bf16.msra.mxu0 %v439
      %727 = vmatprep.subr.bf16.mxu0 %v442
      %728 = vmatpush1.bf16.msra.mxu0 %v441
      %729 = vmatprep.subr.bf16.mxu0 %v444
      %730 = vmatpush1.bf16.msra.mxu0 %v443
      %731 = vmatprep.subr.bf16.mxu0 %v446
      %732 = vmatpush1.bf16.msra.mxu0 %v445
      %733 = vmatprep.subr.bf16.mxu0 %v448
      %734 = vmatpush1.bf16.msra.mxu0 %v447
      %735 = vmatprep.subr.bf16.mxu0 %v450
      %736 = vmatpush1.bf16.msra.mxu0 %v449
      %737 = vmatprep.subr.bf16.mxu0 %v452
      %738 = vmatpush1.bf16.msra.mxu0 %v451
      %739 = vmatprep.subr.bf16.mxu0 %v454
      %740 = vmatpush1.bf16.msra.mxu0 %v453
      %741 = vmatprep.subr.bf16.mxu0 %v456
      %742 = vmatpush1.bf16.msra.mxu0 %v455
      %743 = vmatprep.subr.bf16.mxu0 %v458
      %744 = vmatpush1.bf16.msra.mxu0 %v457
      %745 = vmatprep.subr.bf16.mxu0 %v460
      %746 = vmatpush1.bf16.msra.mxu0 %v459
      %747 = vmatprep.subr.bf16.mxu0 0
      %748 = vmatpush1.bf16.msra.mxu0 0
      %749 = vmatprep.subr.bf16.mxu0 0
      %750 = vmatpush1.bf16.msra.mxu0 0
      %751 = vmatprep.mubr.bf16.mxu0 %v596
      %752 = vmatmul.mubr.bf16.gmra.mrb[0].mxu0 %v547
      %v753 = vpop.f32.mrb[0].mxu0
      %v754 = vadd.f32 %v651, %v753
      %v755 = vpop.f32.mrb[0].mxu0
      %v756 = vadd.f32 %v653, %v755
      %v757 = vpop.f32.mrb[0].mxu0
      %v758 = vadd.f32 %v655, %v757
      %v759 = vpop.f32.mrb[0].mxu0
      %v760 = vadd.f32 %v657, %v759
      %761 = vmatprep.mubr.bf16.mxu0 %v599
      %762 = vmatmul.mubr.bf16.gmra.mrb[0].mxu0 %v551
      %v763 = vpop.f32.mrb[0].mxu0
      %v764 = vadd.f32 %v661, %v763
      %v765 = vpop.f32.mrb[0].mxu0
      %v766 = vadd.f32 %v663, %v765
      %v767 = vpop.f32.mrb[0].mxu0
      %v768 = vadd.f32 %v665, %v767
      %v769 = vpop.f32.mrb[0].mxu0
      %v770 = vadd.f32 %v667, %v769
      %771 = vmatprep.mubr.bf16.mxu0 %v602
      %772 = vmatmul.mubr.bf16.gmra.mrb[0].mxu0 %v555
      %v773 = vpop.f32.mrb[0].mxu0
      %v774 = vadd.f32 %v671, %v773
      %v775 = vpop.f32.mrb[0].mxu0
      %v776 = vadd.f32 %v673, %v775
      %v777 = vpop.f32.mrb[0].mxu0
      %v778 = vadd.f32 %v675, %v777
      %v779 = vpop.f32.mrb[0].mxu0
      %v780 = vadd.f32 %v677, %v779
      %781 = vmatprep.mubr.bf16.mxu0 %v605
      %782 = vmatmul.mubr.bf16.gmra.mrb[0].mxu0 %v559
      %v783 = vpop.f32.mrb[0].mxu0
      %v784 = vadd.f32 %v681, %v783
      %v785 = vpop.f32.mrb[0].mxu0
      %v786 = vadd.f32 %v683, %v785
      %v787 = vpop.f32.mrb[0].mxu0
      %v788 = vadd.f32 %v685, %v787
      %v789 = vpop.f32.mrb[0].mxu0
      %v790 = vadd.f32 %v687, %v789
      %791 = vmatprep.mubr.bf16.mxu0 %v608
      %792 = vmatmul.mubr.bf16.gmra.mrb[0].mxu0 %v563
      %v793 = vpop.f32.mrb[0].mxu0
      %v794 = vadd.f32 %v691, %v793
      %v795 = vpop.f32.mrb[0].mxu0
      %v796 = vadd.f32 %v693, %v795
      %v797 = vpop.f32.mrb[0].mxu0
      %v798 = vadd.f32 %v695, %v797
      %v799 = vpop.f32.mrb[0].mxu0
      %v800 = vadd.f32 %v697, %v799
      %801 = vmatprep.mubr.bf16.mxu0 %v611
      %802 = vmatmul.mubr.bf16.gmra.mrb[0].mxu0 %v567
      %v803 = vpop.f32.mrb[0].mxu0
      %v804 = vadd.f32 %v701, %v803
      %v805 = vpop.f32.mrb[0].mxu0
      %v806 = vadd.f32 %v703, %v805
      %v807 = vpop.f32.mrb[0].mxu0
      %v808 = vadd.f32 %v705, %v807
      %v809 = vpop.f32.mrb[0].mxu0
      %v810 = vadd.f32 %v707, %v809
      %811 = vmatprep.mubr.bf16.mxu0 %v614
      %812 = vmatmul.mubr.bf16.gmra.mrb[0].mxu0 %v571
      %v813 = vpop.f32.mrb[0].mxu0
      %v814 = vadd.f32 %v711, %v813
      %v815 = vpop.f32.mrb[0].mxu0
      %v816 = vadd.f32 %v713, %v815
      %v817 = vpop.f32.mrb[0].mxu0
      %v818 = vadd.f32 %v715, %v817
      %v819 = vpop.f32.mrb[0].mxu0
      %v820 = vadd.f32 %v717, %v819
      %821 = vdwg.mxu0
      %v822 = vld [vmem:[%s1] sm:$0xff]
      %v823 = vld [vmem:[%s1 + $0x8] sm:$0xff]
      %v824 = vld [vmem:[%s1 + $0x10] sm:$0xff]
      %v825 = vld [vmem:[%s1 + $0x18] sm:$0xff]
      %v826 = vld [vmem:[%s1 + $0x20] sm:$0xff]
      %v827 = vld [vmem:[%s1 + $0x28] sm:$0xff]
      %v828 = vld [vmem:[%s1 + $0x30] sm:$0xff]
      %v829 = vld [vmem:[%s1 + $0x38] sm:$0xff]
      %v830 = vld [vmem:[%s1 + $0x40] sm:$0xff]
      %v831 = vld [vmem:[%s1 + $0x48] sm:$0xff]
      %v832 = vld [vmem:[%s1 + $0x50] sm:$0xff]
      %v833 = vld [vmem:[%s1 + $0x58] sm:$0xff]
      %v834 = vld [vmem:[%s1 + $0x60] sm:$0xff]
      %v835 = vld [vmem:[%s1 + $0x68] sm:$0xff]
      %v836 = vld [vmem:[%s1 + $0x70] sm:$0xff]
      %v837 = vld [vmem:[%s1 + $0x78] sm:$0xff]
      %v838 = vld [vmem:[%s1 + $0x80] sm:$0xff]
      %v839 = vld [vmem:[%s1 + $0x88] sm:$0xff]
      %v840 = vld [vmem:[%s1 + $0x90] sm:$0xff]
      %v841 = vld [vmem:[%s1 + $0x98] sm:$0xff]
      %v842 = vld [vmem:[%s1 + $0xa0] sm:$0xff]
      %v843 = vld [vmem:[%s1 + $0xa8] sm:$0xff]
      %v844 = vld [vmem:[%s1 + $0xb0] sm:$0xff]
      %v845 = vld [vmem:[%s1 + $0xb8] sm:$0xff]
      %v846 = vld [vmem:[%s1 + $0xc0] sm:$0xff]
      %v847 = vld [vmem:[%s1 + $0xc8] sm:$0xff]
      %v848 = vld [vmem:[%s1 + $0xd0] sm:$0xff]
      %v849 = vld [vmem:[%s1 + $0xd8] sm:$0xff]
      %v850 = vadd.f32 %v822, %v754
      %v851 = vadd.f32 %v823, %v756
      %v852 = vadd.f32 %v824, %v758
      %v853 = vadd.f32 %v825, %v760
      %v854 = vadd.f32 %v826, %v764
      %v855 = vadd.f32 %v827, %v766
      %v856 = vadd.f32 %v828, %v768
      %v857 = vadd.f32 %v829, %v770
      %v858 = vadd.f32 %v830, %v774
      %v859 = vadd.f32 %v831, %v776
      %v860 = vadd.f32 %v832, %v778
      %v861 = vadd.f32 %v833, %v780
      %v862 = vadd.f32 %v834, %v784
      %v863 = vadd.f32 %v835, %v786
      %v864 = vadd.f32 %v836, %v788
      %v865 = vadd.f32 %v837, %v790
      %v866 = vadd.f32 %v838, %v794
      %v867 = vadd.f32 %v839, %v796
      %v868 = vadd.f32 %v840, %v798
      %v869 = vadd.f32 %v841, %v800
      %v870 = vadd.f32 %v842, %v804
      %v871 = vadd.f32 %v843, %v806
      %v872 = vadd.f32 %v844, %v808
      %v873 = vadd.f32 %v845, %v810
      %v874 = vadd.f32 %v846, %v814
      %v875 = vadd.f32 %v847, %v816
      %v876 = vadd.f32 %v848, %v818
      %v877 = vadd.f32 %v849, %v820
      %v878 = vpack.c.bf16 %v852, %v850
      %v879 = vpack.c.bf16 %v853, %v851
      %v880 = vpack.c.bf16 %v856, %v854
      %v881 = vpack.c.bf16 %v857, %v855
      %v882 = vpack.c.bf16 %v860, %v858
      %v883 = vpack.c.bf16 %v861, %v859
      %v884 = vpack.c.bf16 %v864, %v862
      %v885 = vpack.c.bf16 %v865, %v863
      %v886 = vpack.c.bf16 %v868, %v866
      %v887 = vpack.c.bf16 %v869, %v867
      %v888 = vpack.c.bf16 %v872, %v870
      %v889 = vpack.c.bf16 %v873, %v871
      %v890 = vpack.c.bf16 %v876, %v874
      %v891 = vpack.c.bf16 %v877, %v875
      %v892 = vld [vmem:[%s237] sm:$0xf]
      %v893 = vld [vmem:[%s237 + $0x4] sm:$0xf]
      %v894 = vld [vmem:[%s237 + $0x8] sm:$0xf]
      %v895 = vld [vmem:[%s237 + $0xc] sm:$0xf]
      %v896 = vld [vmem:[%s237 + $0x10] sm:$0xf]
      %v897 = vld [vmem:[%s237 + $0x14] sm:$0xf]
      %v898 = vld [vmem:[%s237 + $0x18] sm:$0xf]
      %v899 = vld [vmem:[%s237 + $0x1c] sm:$0xf]
      %v900 = vld [vmem:[%s237 + $0x20] sm:$0xf]
      %v901 = vld [vmem:[%s237 + $0x24] sm:$0xf]
      %v902 = vld [vmem:[%s237 + $0x28] sm:$0xf]
      %v903 = vld [vmem:[%s237 + $0x2c] sm:$0xf]
      %v904 = vld [vmem:[%s237 + $0x30] sm:$0xf]
      %v905 = vld [vmem:[%s237 + $0x34] sm:$0xf]
      %v906 = vld [vmem:[%s237 + $0x38] sm:$0xf]
      %v907 = vld [vmem:[%s237 + $0x3c] sm:$0xf]
      %v908 = vld [vmem:[%s237 + $0x40] sm:$0xf]
      %v909 = vld [vmem:[%s237 + $0x44] sm:$0xf]
      %v910 = vld [vmem:[%s237 + $0x48] sm:$0xf]
      %v911 = vld [vmem:[%s237 + $0x4c] sm:$0xf]
      %v912 = vld [vmem:[%s237 + $0x50] sm:$0xf]
      %v913 = vld [vmem:[%s237 + $0x54] sm:$0xf]
      %v914 = vld [vmem:[%s237 + $0x58] sm:$0xf]
      %v915 = vld [vmem:[%s237 + $0x5c] sm:$0xf]
      %v916 = vld [vmem:[%s237 + $0x60] sm:$0xf]
      %v917 = vld [vmem:[%s237 + $0x64] sm:$0xf]
      %v918 = vld [vmem:[%s237 + $0x68] sm:$0xf]
      %v919 = vld [vmem:[%s237 + $0x6c] sm:$0xf]
      %v920 = vld [vmem:[%s237 + $0x70] sm:$0xf]
      %v921 = vld [vmem:[%s237 + $0x74] sm:$0xf]
      %v922 = vld [vmem:[%s237 + $0x78] sm:$0xf]
      %v923 = vld [vmem:[%s237 + $0x7c] sm:$0xf]
      %v924 = vld [vmem:[%s237 + $0x80] sm:$0xf]
      %v925 = vld [vmem:[%s237 + $0x84] sm:$0xf]
      %v926 = vld [vmem:[%s237 + $0x88] sm:$0xf]
      %v927 = vld [vmem:[%s237 + $0x8c] sm:$0xf]
      %v928 = vld [vmem:[%s237 + $0x90] sm:$0xf]
      %v929 = vld [vmem:[%s237 + $0x94] sm:$0xf]
      %v930 = vld [vmem:[%s237 + $0x98] sm:$0xf]
      %v931 = vld [vmem:[%s237 + $0x9c] sm:$0xf]
      %v932 = vld [vmem:[%s237 + $0xa0] sm:$0xf]
      %v933 = vld [vmem:[%s237 + $0xa4] sm:$0xf]
      %v934 = vld [vmem:[%s243] sm:$0xff]
      %v935 = vld [vmem:[%s243 + $0x8] sm:$0xff]
      %v936 = vld [vmem:[%s243 + $0x10] sm:$0xff]
      %v937 = vld [vmem:[%s243 + $0x18] sm:$0xff]
      %v938 = vld [vmem:[%s243 + $0x20] sm:$0xff]
      %v939 = vld [vmem:[%s243 + $0x28] sm:$0xff]
      %v940 = vld [vmem:[%s243 + $0x30] sm:$0xff]
      %v941 = vld [vmem:[%s243 + $0x38] sm:$0xff]
      %v942 = vld [vmem:[%s243 + $0x40] sm:$0xff]
      %v943 = vld [vmem:[%s243 + $0x48] sm:$0xff]
      %v944 = vld [vmem:[%s243 + $0x50] sm:$0xff]
      %v945 = vld [vmem:[%s243 + $0x58] sm:$0xff]
      %v946 = vld [vmem:[%s243 + $0x60] sm:$0xff]
      %v947 = vld [vmem:[%s243 + $0x68] sm:$0xff]
      %v948 = vld [vmem:[%s243 + $0x70] sm:$0xff]
      %v949 = vld [vmem:[%s243 + $0x78] sm:$0xff]
      %v950 = vld [vmem:[%s243 + $0x80] sm:$0xff]
      %v951 = vld [vmem:[%s243 + $0x88] sm:$0xff]
      %v952 = vld [vmem:[%s243 + $0x90] sm:$0xff]
      %v953 = vld [vmem:[%s243 + $0x98] sm:$0xff]
      %v954 = vld [vmem:[%s243 + $0xa0] sm:$0xff]
      %v955 = vld [vmem:[%s243 + $0xa8] sm:$0xff]
      %v956 = vld [vmem:[%s243 + $0xb0] sm:$0xff]
      %v957 = vld [vmem:[%s243 + $0xb8] sm:$0xff]
      %v958 = vld [vmem:[%s243 + $0xc0] sm:$0xff]
      %v959 = vld [vmem:[%s243 + $0xc8] sm:$0xff]
      %v960 = vld [vmem:[%s243 + $0xd0] sm:$0xff]
      %v961 = vld [vmem:[%s243 + $0xd8] sm:$0xff]
      %v962 = vld [vmem:[%s243 + $0xe0] sm:$0xff]
      %v963 = vld [vmem:[%s243 + $0xe8] sm:$0xff]
      %v964 = vld [vmem:[%s243 + $0xf0] sm:$0xff]
      %v965 = vld [vmem:[%s243 + $0xf8] sm:$0xff]
      %v966 = vld [vmem:[%s243 + $0x100] sm:$0xff]
      %v967 = vld [vmem:[%s243 + $0x108] sm:$0xff]
      %v968 = vld [vmem:[%s243 + $0x110] sm:$0xff]
      %v969 = vld [vmem:[%s243 + $0x118] sm:$0xff]
      %v970 = vld [vmem:[%s243 + $0x120] sm:$0xff]
      %v971 = vld [vmem:[%s243 + $0x128] sm:$0xff]
      %v972 = vld [vmem:[%s243 + $0x130] sm:$0xff]
      %v973 = vld [vmem:[%s243 + $0x138] sm:$0xff]
      %v974 = vld [vmem:[%s243 + $0x140] sm:$0xff]
      %v975 = vld [vmem:[%s243 + $0x148] sm:$0xff]
      %977 = vset.pattern.permute.xlu0 0
      %978 = vperm.xlu0 %977, %v934
      %v979 = vpop.permute.xlu0 %978
      %982 = vset.pattern.permute.xlu0 0
      %983 = vperm.xlu0 %982, %v935
      %v984 = vpop.permute.xlu0 %983
      %987 = vset.pattern.permute.xlu0 0
      %988 = vperm.xlu0 %987, %v936
      %v989 = vpop.permute.xlu0 %988
      %992 = vset.pattern.permute.xlu0 0
      %993 = vperm.xlu0 %992, %v937
      %v994 = vpop.permute.xlu0 %993
      %997 = vset.pattern.permute.xlu0 0
      %998 = vperm.xlu0 %997, %v938
      %v999 = vpop.permute.xlu0 %998
      %1002 = vset.pattern.permute.xlu0 0
      %1003 = vperm.xlu0 %1002, %v939
      %v1004 = vpop.permute.xlu0 %1003
      %1007 = vset.pattern.permute.xlu0 0
      %1008 = vperm.xlu0 %1007, %v940
      %v1009 = vpop.permute.xlu0 %1008
      %1012 = vset.pattern.permute.xlu0 0
      %1013 = vperm.xlu0 %1012, %v941
      %v1014 = vpop.permute.xlu0 %1013
      %1017 = vset.pattern.permute.xlu0 0
      %1018 = vperm.xlu0 %1017, %v942
      %v1019 = vpop.permute.xlu0 %1018
      %1022 = vset.pattern.permute.xlu0 0
      %1023 = vperm.xlu0 %1022, %v943
      %v1024 = vpop.permute.xlu0 %1023
      %1027 = vset.pattern.permute.xlu0 0
      %1028 = vperm.xlu0 %1027, %v944
      %v1029 = vpop.permute.xlu0 %1028
      %1032 = vset.pattern.permute.xlu0 0
      %1033 = vperm.xlu0 %1032, %v945
      %v1034 = vpop.permute.xlu0 %1033
      %1037 = vset.pattern.permute.xlu0 0
      %1038 = vperm.xlu0 %1037, %v946
      %v1039 = vpop.permute.xlu0 %1038
      %1042 = vset.pattern.permute.xlu0 0
      %1043 = vperm.xlu0 %1042, %v947
      %v1044 = vpop.permute.xlu0 %1043
      %1047 = vset.pattern.permute.xlu0 0
      %1048 = vperm.xlu0 %1047, %v948
      %v1049 = vpop.permute.xlu0 %1048
      %1052 = vset.pattern.permute.xlu0 0
      %1053 = vperm.xlu0 %1052, %v949
      %v1054 = vpop.permute.xlu0 %1053
      %1057 = vset.pattern.permute.xlu0 0
      %1058 = vperm.xlu0 %1057, %v950
      %v1059 = vpop.permute.xlu0 %1058
      %1062 = vset.pattern.permute.xlu0 0
      %1063 = vperm.xlu0 %1062, %v951
      %v1064 = vpop.permute.xlu0 %1063
      %1067 = vset.pattern.permute.xlu0 0
      %1068 = vperm.xlu0 %1067, %v952
      %v1069 = vpop.permute.xlu0 %1068
      %1072 = vset.pattern.permute.xlu0 0
      %1073 = vperm.xlu0 %1072, %v953
      %v1074 = vpop.permute.xlu0 %1073
      %1077 = vset.pattern.permute.xlu0 0
      %1078 = vperm.xlu0 %1077, %v954
      %v1079 = vpop.permute.xlu0 %1078
      %1082 = vset.pattern.permute.xlu0 0
      %1083 = vperm.xlu0 %1082, %v955
      %v1084 = vpop.permute.xlu0 %1083
      %1087 = vset.pattern.permute.xlu0 0
      %1088 = vperm.xlu0 %1087, %v956
      %v1089 = vpop.permute.xlu0 %1088
      %1092 = vset.pattern.permute.xlu0 0
      %1093 = vperm.xlu0 %1092, %v957
      %v1094 = vpop.permute.xlu0 %1093
      %1097 = vset.pattern.permute.xlu0 0
      %1098 = vperm.xlu0 %1097, %v958
      %v1099 = vpop.permute.xlu0 %1098
      %1102 = vset.pattern.permute.xlu0 0
      %1103 = vperm.xlu0 %1102, %v959
      %v1104 = vpop.permute.xlu0 %1103
      %1107 = vset.pattern.permute.xlu0 0
      %1108 = vperm.xlu0 %1107, %v960
      %v1109 = vpop.permute.xlu0 %1108
      %1112 = vset.pattern.permute.xlu0 0
      %1113 = vperm.xlu0 %1112, %v961
      %v1114 = vpop.permute.xlu0 %1113
      %1117 = vset.pattern.permute.xlu0 0
      %1118 = vperm.xlu0 %1117, %v962
      %v1119 = vpop.permute.xlu0 %1118
      %1122 = vset.pattern.permute.xlu0 0
      %1123 = vperm.xlu0 %1122, %v963
      %v1124 = vpop.permute.xlu0 %1123
      %1127 = vset.pattern.permute.xlu0 0
      %1128 = vperm.xlu0 %1127, %v964
      %v1129 = vpop.permute.xlu0 %1128
      %1132 = vset.pattern.permute.xlu0 0
      %1133 = vperm.xlu0 %1132, %v965
      %v1134 = vpop.permute.xlu0 %1133
      %1137 = vset.pattern.permute.xlu0 0
      %1138 = vperm.xlu0 %1137, %v966
      %v1139 = vpop.permute.xlu0 %1138
      %1142 = vset.pattern.permute.xlu0 0
      %1143 = vperm.xlu0 %1142, %v967
      %v1144 = vpop.permute.xlu0 %1143
      %1147 = vset.pattern.permute.xlu0 0
      %1148 = vperm.xlu0 %1147, %v968
      %v1149 = vpop.permute.xlu0 %1148
      %1152 = vset.pattern.permute.xlu0 0
      %1153 = vperm.xlu0 %1152, %v969
      %v1154 = vpop.permute.xlu0 %1153
      %1157 = vset.pattern.permute.xlu0 0
      %1158 = vperm.xlu0 %1157, %v970
      %v1159 = vpop.permute.xlu0 %1158
      %1162 = vset.pattern.permute.xlu0 0
      %1163 = vperm.xlu0 %1162, %v971
      %v1164 = vpop.permute.xlu0 %1163
      %1167 = vset.pattern.permute.xlu0 0
      %1168 = vperm.xlu0 %1167, %v972
      %v1169 = vpop.permute.xlu0 %1168
      %1172 = vset.pattern.permute.xlu0 0
      %1173 = vperm.xlu0 %1172, %v973
      %v1174 = vpop.permute.xlu0 %1173
      %1177 = vset.pattern.permute.xlu0 0
      %1178 = vperm.xlu0 %1177, %v974
      %v1179 = vpop.permute.xlu0 %1178
      %1182 = vset.pattern.permute.xlu0 0
      %1183 = vperm.xlu0 %1182, %v975
      %v1184 = vpop.permute.xlu0 %1183
      %v1228 = vunpack.c.l.b16 %v892
      %v1229 = vunpack.c.l.b16 %v893
      %v1230 = vunpack.c.l.b16 %v894
      %v1231 = vunpack.c.l.b16 %v895
      %v1232 = vunpack.c.l.b16 %v896
      %v1233 = vunpack.c.l.b16 %v897
      %v1234 = vunpack.c.l.b16 %v898
      %v1235 = vunpack.c.l.b16 %v899
      %v1236 = vunpack.c.l.b16 %v900
      %v1237 = vunpack.c.l.b16 %v901
      %v1238 = vunpack.c.l.b16 %v902
      %v1239 = vunpack.c.l.b16 %v903
      %v1240 = vunpack.c.l.b16 %v904
      %v1241 = vunpack.c.l.b16 %v905
      %v1242 = vunpack.c.l.b16 %v906
      %v1243 = vunpack.c.l.b16 %v907
      %v1244 = vunpack.c.l.b16 %v908
      %v1245 = vunpack.c.l.b16 %v909
      %v1246 = vunpack.c.l.b16 %v910
      %v1247 = vunpack.c.l.b16 %v911
      %v1248 = vunpack.c.l.b16 %v912
      %v1249 = vunpack.c.l.b16 %v913
      %v1250 = vunpack.c.l.b16 %v914
      %v1251 = vunpack.c.l.b16 %v915
      %v1252 = vunpack.c.l.b16 %v916
      %v1253 = vunpack.c.l.b16 %v917
      %v1254 = vunpack.c.l.b16 %v918
      %v1255 = vunpack.c.l.b16 %v919
      %v1256 = vunpack.c.l.b16 %v920
      %v1257 = vunpack.c.l.b16 %v921
      %v1258 = vunpack.c.l.b16 %v922
      %v1259 = vunpack.c.l.b16 %v923
      %v1260 = vunpack.c.l.b16 %v924
      %v1261 = vunpack.c.l.b16 %v925
      %v1262 = vunpack.c.l.b16 %v926
      %v1263 = vunpack.c.l.b16 %v927
      %v1264 = vunpack.c.l.b16 %v928
      %v1265 = vunpack.c.l.b16 %v929
      %v1266 = vunpack.c.l.b16 %v930
      %v1267 = vunpack.c.l.b16 %v931
      %v1268 = vunpack.c.l.b16 %v932
      %v1269 = vunpack.c.l.b16 %v933
      %v1270 = vpack.c.b16 %v1229, %v1228
      %v1271 = vpack.c.b16 %v1231, %v1230
      %v1272 = vpack.c.b16 %v1233, %v1232
      %v1273 = vpack.c.b16 %v1235, %v1234
      %v1274 = vpack.c.b16 %v1237, %v1236
      %v1275 = vpack.c.b16 %v1239, %v1238
      %v1276 = vpack.c.b16 %v1241, %v1240
      %v1277 = vpack.c.b16 %v1243, %v1242
      %v1278 = vpack.c.b16 %v1245, %v1244
      %v1279 = vpack.c.b16 %v1247, %v1246
      %v1280 = vpack.c.b16 %v1249, %v1248
      %v1281 = vpack.c.b16 %v1251, %v1250
      %v1282 = vpack.c.b16 %v1253, %v1252
      %v1283 = vpack.c.b16 %v1255, %v1254
      %v1284 = vpack.c.b16 %v1257, %v1256
      %v1285 = vpack.c.b16 %v1259, %v1258
      %v1286 = vpack.c.b16 %v1261, %v1260
      %v1287 = vpack.c.b16 %v1263, %v1262
      %v1288 = vpack.c.b16 %v1265, %v1264
      %v1289 = vpack.c.b16 %v1267, %v1266
      %v1290 = vpack.c.b16 %v1269, %v1268
      %vm1291 = vcmask 916480
      %v1293 = vsel %vm1291, %v1270, 0
      %v1296 = vsel %vm1291, %v1271, 0
      %v1299 = vsel %vm1291, %v1272, 0
      %v1302 = vsel %vm1291, %v1273, 0
      %v1305 = vsel %vm1291, %v1274, 0
      %v1308 = vsel %vm1291, %v1275, 0
      %v1311 = vsel %vm1291, %v1276, 0
      %v1314 = vsel %vm1291, %v1277, 0
      %v1317 = vsel %vm1291, %v1278, 0
      %v1320 = vsel %vm1291, %v1279, 0
      %v1323 = vsel %vm1291, %v1280, 0
      %v1326 = vsel %vm1291, %v1281, 0
      %v1329 = vsel %vm1291, %v1282, 0
      %v1332 = vsel %vm1291, %v1283, 0
      %v1335 = vsel %vm1291, %v1284, 0
      %v1338 = vsel %vm1291, %v1285, 0
      %v1341 = vsel %vm1291, %v1286, 0
      %v1344 = vsel %vm1291, %v1287, 0
      %v1347 = vsel %vm1291, %v1288, 0
      %v1350 = vsel %vm1291, %v1289, 0
      %v1353 = vsel %vm1291, %v1290, 0
      %1355 = vmatprep.subr.bf16.mxu0 %v879
      %1356 = vmatpush1.bf16.msra.mxu0 %v878
      %1357 = vmatprep.subr.bf16.mxu0 %v881
      %1358 = vmatpush1.bf16.msra.mxu0 %v880
      %1359 = vmatprep.subr.bf16.mxu0 %v883
      %1360 = vmatpush1.bf16.msra.mxu0 %v882
      %1361 = vmatprep.subr.bf16.mxu0 %v885
      %1362 = vmatpush1.bf16.msra.mxu0 %v884
      %1363 = vmatprep.subr.bf16.mxu0 %v887
      %1364 = vmatpush1.bf16.msra.mxu0 %v886
      %1365 = vmatprep.subr.bf16.mxu0 %v889
      %1366 = vmatpush1.bf16.msra.mxu0 %v888
      %1367 = vmatprep.subr.bf16.mxu0 %v891
      %1368 = vmatpush1.bf16.msra.mxu0 %v890
      %1369 = vmatprep.subr.bf16.mxu0 0
      %1370 = vmatpush1.bf16.msra.mxu0 0
      %1371 = vmatprep.subr.bf16.mxu0 0
      %1372 = vmatpush1.bf16.msra.mxu0 0
      %1373 = vmatprep.subr.bf16.mxu0 0
      %1374 = vmatpush1.bf16.msra.mxu0 0
      %1375 = vmatprep.subr.bf16.mxu0 0
      %1376 = vmatpush1.bf16.msra.mxu0 0
      %1377 = vmatprep.subr.bf16.mxu0 0
      %1378 = vmatpush1.bf16.msra.mxu0 0
      %1379 = vmatprep.subr.bf16.mxu0 0
      %1380 = vmatpush1.bf16.msra.mxu0 0
      %1381 = vmatprep.subr.bf16.mxu0 0
      %1382 = vmatpush1.bf16.msra.mxu0 0
      %1383 = vmatprep.subr.bf16.mxu0 0
      %1384 = vmatpush1.bf16.msra.mxu0 0
      %1385 = vmatprep.subr.bf16.mxu0 0
      %1386 = vmatpush1.bf16.msra.mxu0 0
      %1387 = vmatprep.mubr.bf16.mxu0 0
      %1388 = vmatmul.mubr.bf16.gmra.mrb[0].mxu0 %v1293
      %v1389 = vpop.f32.mrb[0].mxu0
      %v1390 = vadd.f32 %v979, %v1389
      %v1391 = vpop.f32.mrb[0].mxu0
      %v1392 = vadd.f32 %v979, %v1391
      %v1393 = vpop.f32.mrb[0].mxu0
      %v1394 = vadd.f32 %v984, %v1393
      %v1395 = vpop.f32.mrb[0].mxu0
      %v1396 = vadd.f32 %v984, %v1395
      %1397 = vmatprep.mubr.bf16.mxu0 0
      %1398 = vmatmul.mubr.bf16.gmra.mrb[0].mxu0 %v1296
      %v1399 = vpop.f32.mrb[0].mxu0
      %v1400 = vadd.f32 %v989, %v1399
      %v1401 = vpop.f32.mrb[0].mxu0
      %v1402 = vadd.f32 %v989, %v1401
      %v1403 = vpop.f32.mrb[0].mxu0
      %v1404 = vadd.f32 %v994, %v1403
      %v1405 = vpop.f32.mrb[0].mxu0
      %v1406 = vadd.f32 %v994, %v1405
      %1407 = vmatprep.mubr.bf16.mxu0 0
      %1408 = vmatmul.mubr.bf16.gmra.mrb[0].mxu0 %v1299
      %v1409 = vpop.f32.mrb[0].mxu0
      %v1410 = vadd.f32 %v999, %v1409
      %v1411 = vpop.f32.mrb[0].mxu0
      %v1412 = vadd.f32 %v999, %v1411
      %v1413 = vpop.f32.mrb[0].mxu0
      %v1414 = vadd.f32 %v1004, %v1413
      %v1415 = vpop.f32.mrb[0].mxu0
      %v1416 = vadd.f32 %v1004, %v1415
      %1417 = vmatprep.mubr.bf16.mxu0 0
      %1418 = vmatmul.mubr.bf16.gmra.mrb[0].mxu0 %v1302
      %v1419 = vpop.f32.mrb[0].mxu0
      %v1420 = vadd.f32 %v1009, %v1419
      %v1421 = vpop.f32.mrb[0].mxu0
      %v1422 = vadd.f32 %v1009, %v1421
      %v1423 = vpop.f32.mrb[0].mxu0
      %v1424 = vadd.f32 %v1014, %v1423
      %v1425 = vpop.f32.mrb[0].mxu0
      %v1426 = vadd.f32 %v1014, %v1425
      %1427 = vmatprep.mubr.bf16.mxu0 0
      %1428 = vmatmul.mubr.bf16.gmra.mrb[0].mxu0 %v1305
      %v1429 = vpop.f32.mrb[0].mxu0
      %v1430 = vadd.f32 %v1019, %v1429
      %v1431 = vpop.f32.mrb[0].mxu0
      %v1432 = vadd.f32 %v1019, %v1431
      %v1433 = vpop.f32.mrb[0].mxu0
      %v1434 = vadd.f32 %v1024, %v1433
      %v1435 = vpop.f32.mrb[0].mxu0
      %v1436 = vadd.f32 %v1024, %v1435
      %1437 = vmatprep.mubr.bf16.mxu0 0
      %1438 = vmatmul.mubr.bf16.gmra.mrb[0].mxu0 %v1308
      %v1439 = vpop.f32.mrb[0].mxu0
      %v1440 = vadd.f32 %v1029, %v1439
      %v1441 = vpop.f32.mrb[0].mxu0
      %v1442 = vadd.f32 %v1029, %v1441
      %v1443 = vpop.f32.mrb[0].mxu0
      %v1444 = vadd.f32 %v1034, %v1443
      %v1445 = vpop.f32.mrb[0].mxu0
      %v1446 = vadd.f32 %v1034, %v1445
      %1447 = vmatprep.mubr.bf16.mxu0 0
      %1448 = vmatmul.mubr.bf16.gmra.mrb[0].mxu0 %v1311
      %v1449 = vpop.f32.mrb[0].mxu0
      %v1450 = vadd.f32 %v1039, %v1449
      %v1451 = vpop.f32.mrb[0].mxu0
      %v1452 = vadd.f32 %v1039, %v1451
      %v1453 = vpop.f32.mrb[0].mxu0
      %v1454 = vadd.f32 %v1044, %v1453
      %v1455 = vpop.f32.mrb[0].mxu0
      %v1456 = vadd.f32 %v1044, %v1455
      %1457 = vmatprep.mubr.bf16.mxu0 0
      %1458 = vmatmul.mubr.bf16.gmra.mrb[0].mxu0 %v1314
      %v1459 = vpop.f32.mrb[0].mxu0
      %v1460 = vadd.f32 %v1049, %v1459
      %v1461 = vpop.f32.mrb[0].mxu0
      %v1462 = vadd.f32 %v1049, %v1461
      %v1463 = vpop.f32.mrb[0].mxu0
      %v1464 = vadd.f32 %v1054, %v1463
      %v1465 = vpop.f32.mrb[0].mxu0
      %v1466 = vadd.f32 %v1054, %v1465
      %1467 = vmatprep.mubr.bf16.mxu0 0
      %1468 = vmatmul.mubr.bf16.gmra.mrb[0].mxu0 %v1317
      %v1469 = vpop.f32.mrb[0].mxu0
      %v1470 = vadd.f32 %v1059, %v1469
      %v1471 = vpop.f32.mrb[0].mxu0
      %v1472 = vadd.f32 %v1059, %v1471
      %v1473 = vpop.f32.mrb[0].mxu0
      %v1474 = vadd.f32 %v1064, %v1473
      %v1475 = vpop.f32.mrb[0].mxu0
      %v1476 = vadd.f32 %v1064, %v1475
      %1477 = vmatprep.mubr.bf16.mxu0 0
      %1478 = vmatmul.mubr.bf16.gmra.mrb[0].mxu0 %v1320
      %v1479 = vpop.f32.mrb[0].mxu0
      %v1480 = vadd.f32 %v1069, %v1479
      %v1481 = vpop.f32.mrb[0].mxu0
      %v1482 = vadd.f32 %v1069, %v1481
      %v1483 = vpop.f32.mrb[0].mxu0
      %v1484 = vadd.f32 %v1074, %v1483
      %v1485 = vpop.f32.mrb[0].mxu0
      %v1486 = vadd.f32 %v1074, %v1485
      %1487 = vmatprep.mubr.bf16.mxu0 0
      %1488 = vmatmul.mubr.bf16.gmra.mrb[0].mxu0 %v1323
      %v1489 = vpop.f32.mrb[0].mxu0
      %v1490 = vadd.f32 %v1079, %v1489
      %v1491 = vpop.f32.mrb[0].mxu0
      %v1492 = vadd.f32 %v1079, %v1491
      %v1493 = vpop.f32.mrb[0].mxu0
      %v1494 = vadd.f32 %v1084, %v1493
      %v1495 = vpop.f32.mrb[0].mxu0
      %v1496 = vadd.f32 %v1084, %v1495
      %1497 = vmatprep.mubr.bf16.mxu0 0
      %1498 = vmatmul.mubr.bf16.gmra.mrb[0].mxu0 %v1326
      %v1499 = vpop.f32.mrb[0].mxu0
      %v1500 = vadd.f32 %v1089, %v1499
      %v1501 = vpop.f32.mrb[0].mxu0
      %v1502 = vadd.f32 %v1089, %v1501
      %v1503 = vpop.f32.mrb[0].mxu0
      %v1504 = vadd.f32 %v1094, %v1503
      %v1505 = vpop.f32.mrb[0].mxu0
      %v1506 = vadd.f32 %v1094, %v1505
      %1507 = vmatprep.mubr.bf16.mxu0 0
      %1508 = vmatmul.mubr.bf16.gmra.mrb[0].mxu0 %v1329
      %v1509 = vpop.f32.mrb[0].mxu0
      %v1510 = vadd.f32 %v1099, %v1509
      %v1511 = vpop.f32.mrb[0].mxu0
      %v1512 = vadd.f32 %v1099, %v1511
      %v1513 = vpop.f32.mrb[0].mxu0
      %v1514 = vadd.f32 %v1104, %v1513
      %v1515 = vpop.f32.mrb[0].mxu0
      %v1516 = vadd.f32 %v1104, %v1515
      %1517 = vmatprep.mubr.bf16.mxu0 0
      %1518 = vmatmul.mubr.bf16.gmra.mrb[0].mxu0 %v1332
      %v1519 = vpop.f32.mrb[0].mxu0
      %v1520 = vadd.f32 %v1109, %v1519
      %v1521 = vpop.f32.mrb[0].mxu0
      %v1522 = vadd.f32 %v1109, %v1521
      %v1523 = vpop.f32.mrb[0].mxu0
      %v1524 = vadd.f32 %v1114, %v1523
      %v1525 = vpop.f32.mrb[0].mxu0
      %v1526 = vadd.f32 %v1114, %v1525
      %1527 = vmatprep.mubr.bf16.mxu0 0
      %1528 = vmatmul.mubr.bf16.gmra.mrb[0].mxu0 %v1335
      %v1529 = vpop.f32.mrb[0].mxu0
      %v1530 = vadd.f32 %v1119, %v1529
      %v1531 = vpop.f32.mrb[0].mxu0
      %v1532 = vadd.f32 %v1119, %v1531
      %v1533 = vpop.f32.mrb[0].mxu0
      %v1534 = vadd.f32 %v1124, %v1533
      %v1535 = vpop.f32.mrb[0].mxu0
      %v1536 = vadd.f32 %v1124, %v1535
      %1537 = vmatprep.mubr.bf16.mxu0 0
      %1538 = vmatmul.mubr.bf16.gmra.mrb[0].mxu0 %v1338
      %v1539 = vpop.f32.mrb[0].mxu0
      %v1540 = vadd.f32 %v1129, %v1539
      %v1541 = vpop.f32.mrb[0].mxu0
      %v1542 = vadd.f32 %v1129, %v1541
      %v1543 = vpop.f32.mrb[0].mxu0
      %v1544 = vadd.f32 %v1134, %v1543
      %v1545 = vpop.f32.mrb[0].mxu0
      %v1546 = vadd.f32 %v1134, %v1545
      %1547 = vmatprep.mubr.bf16.mxu0 0
      %1548 = vmatmul.mubr.bf16.gmra.mrb[0].mxu0 %v1341
      %v1549 = vpop.f32.mrb[0].mxu0
      %v1550 = vadd.f32 %v1139, %v1549
      %v1551 = vpop.f32.mrb[0].mxu0
      %v1552 = vadd.f32 %v1139, %v1551
      %v1553 = vpop.f32.mrb[0].mxu0
      %v1554 = vadd.f32 %v1144, %v1553
      %v1555 = vpop.f32.mrb[0].mxu0
      %v1556 = vadd.f32 %v1144, %v1555
      %1557 = vmatprep.mubr.bf16.mxu0 0
      %1558 = vmatmul.mubr.bf16.gmra.mrb[0].mxu0 %v1344
      %v1559 = vpop.f32.mrb[0].mxu0
      %v1560 = vadd.f32 %v1149, %v1559
      %v1561 = vpop.f32.mrb[0].mxu0
      %v1562 = vadd.f32 %v1149, %v1561
      %v1563 = vpop.f32.mrb[0].mxu0
      %v1564 = vadd.f32 %v1154, %v1563
      %v1565 = vpop.f32.mrb[0].mxu0
      %v1566 = vadd.f32 %v1154, %v1565
      %1567 = vmatprep.mubr.bf16.mxu0 0
      %1568 = vmatmul.mubr.bf16.gmra.mrb[0].mxu0 %v1347
      %v1569 = vpop.f32.mrb[0].mxu0
      %v1570 = vadd.f32 %v1159, %v1569
      %v1571 = vpop.f32.mrb[0].mxu0
      %v1572 = vadd.f32 %v1159, %v1571
      %v1573 = vpop.f32.mrb[0].mxu0
      %v1574 = vadd.f32 %v1164, %v1573
      %v1575 = vpop.f32.mrb[0].mxu0
      %v1576 = vadd.f32 %v1164, %v1575
      %1577 = vmatprep.mubr.bf16.mxu0 0
      %1578 = vmatmul.mubr.bf16.gmra.mrb[0].mxu0 %v1350
      %v1579 = vpop.f32.mrb[0].mxu0
      %v1580 = vadd.f32 %v1169, %v1579
      %v1581 = vpop.f32.mrb[0].mxu0
      %v1582 = vadd.f32 %v1169, %v1581
      %v1583 = vpop.f32.mrb[0].mxu0
      %v1584 = vadd.f32 %v1174, %v1583
      %v1585 = vpop.f32.mrb[0].mxu0
      %v1586 = vadd.f32 %v1174, %v1585
      %1587 = vmatprep.mubr.bf16.mxu0 0
      %1588 = vmatmul.mubr.bf16.gmra.mrb[0].mxu0 %v1353
      %v1589 = vpop.f32.mrb[0].mxu0
      %v1590 = vadd.f32 %v1179, %v1589
      %v1591 = vpop.f32.mrb[0].mxu0
      %v1592 = vadd.f32 %v1179, %v1591
      %v1593 = vpop.f32.mrb[0].mxu0
      %v1594 = vadd.f32 %v1184, %v1593
      %v1595 = vpop.f32.mrb[0].mxu0
      %v1596 = vadd.f32 %v1184, %v1595
      %1597 = vdwg.mxu0
      %1598 = vst [vmem:[%s250] sm:$0xff] %v1390
      %vm1599 = vcmask 556032
      %1600 = vst.msk [vmem:[%s250 + $0x8] sm:$0xff] %vm1599, %v1392
      %1601 = vst [vmem:[%s250 + $0x10] sm:$0xff] %v1394
      %1602 = vst.msk [vmem:[%s250 + $0x18] sm:$0xff] %vm1599, %v1396
      %1603 = vst [vmem:[%s250 + $0x20] sm:$0xff] %v1400
      %1604 = vst.msk [vmem:[%s250 + $0x28] sm:$0xff] %vm1599, %v1402
      %1605 = vst [vmem:[%s250 + $0x30] sm:$0xff] %v1404
      %1606 = vst.msk [vmem:[%s250 + $0x38] sm:$0xff] %vm1599, %v1406
      %1607 = vst [vmem:[%s250 + $0x40] sm:$0xff] %v1410
      %1608 = vst.msk [vmem:[%s250 + $0x48] sm:$0xff] %vm1599, %v1412
      %1609 = vst [vmem:[%s250 + $0x50] sm:$0xff] %v1414
      %1610 = vst.msk [vmem:[%s250 + $0x58] sm:$0xff] %vm1599, %v1416
      %1611 = vst [vmem:[%s250 + $0x60] sm:$0xff] %v1420
      %1612 = vst.msk [vmem:[%s250 + $0x68] sm:$0xff] %vm1599, %v1422
      %1613 = vst [vmem:[%s250 + $0x70] sm:$0xff] %v1424
      %1614 = vst.msk [vmem:[%s250 + $0x78] sm:$0xff] %vm1599, %v1426
      %1615 = vst [vmem:[%s250 + $0x80] sm:$0xff] %v1430
      %1616 = vst.msk [vmem:[%s250 + $0x88] sm:$0xff] %vm1599, %v1432
      %1617 = vst [vmem:[%s250 + $0x90] sm:$0xff] %v1434
      %1618 = vst.msk [vmem:[%s250 + $0x98] sm:$0xff] %vm1599, %v1436
      %1619 = vst [vmem:[%s250 + $0xa0] sm:$0xff] %v1440
      %1620 = vst.msk [vmem:[%s250 + $0xa8] sm:$0xff] %vm1599, %v1442
      %1621 = vst [vmem:[%s250 + $0xb0] sm:$0xff] %v1444
      %1622 = vst.msk [vmem:[%s250 + $0xb8] sm:$0xff] %vm1599, %v1446
      %1623 = vst [vmem:[%s250 + $0xc0] sm:$0xff] %v1450
      %1624 = vst.msk [vmem:[%s250 + $0xc8] sm:$0xff] %vm1599, %v1452
      %1625 = vst [vmem:[%s250 + $0xd0] sm:$0xff] %v1454
      %1626 = vst.msk [vmem:[%s250 + $0xd8] sm:$0xff] %vm1599, %v1456
      %1627 = vst [vmem:[%s250 + $0xe0] sm:$0xff] %v1460
      %1628 = vst.msk [vmem:[%s250 + $0xe8] sm:$0xff] %vm1599, %v1462
      %1629 = vst [vmem:[%s250 + $0xf0] sm:$0xff] %v1464
      %1630 = vst.msk [vmem:[%s250 + $0xf8] sm:$0xff] %vm1599, %v1466
      %1631 = vst [vmem:[%s250 + $0x100] sm:$0xff] %v1470
      %1632 = vst.msk [vmem:[%s250 + $0x108] sm:$0xff] %vm1599, %v1472
      %1633 = vst [vmem:[%s250 + $0x110] sm:$0xff] %v1474
      %1634 = vst.msk [vmem:[%s250 + $0x118] sm:$0xff] %vm1599, %v1476
      %1635 = vst [vmem:[%s250 + $0x120] sm:$0xff] %v1480
      %1636 = vst.msk [vmem:[%s250 + $0x128] sm:$0xff] %vm1599, %v1482
      %1637 = vst [vmem:[%s250 + $0x130] sm:$0xff] %v1484
      %1638 = vst.msk [vmem:[%s250 + $0x138] sm:$0xff] %vm1599, %v1486
      %1639 = vst [vmem:[%s250 + $0x140] sm:$0xff] %v1490
      %1640 = vst.msk [vmem:[%s250 + $0x148] sm:$0xff] %vm1599, %v1492
      %1641 = vst [vmem:[%s250 + $0x150] sm:$0xff] %v1494
      %1642 = vst.msk [vmem:[%s250 + $0x158] sm:$0xff] %vm1599, %v1496
      %1643 = vst [vmem:[%s250 + $0x160] sm:$0xff] %v1500
      %1644 = vst.msk [vmem:[%s250 + $0x168] sm:$0xff] %vm1599, %v1502
      %1645 = vst [vmem:[%s250 + $0x170] sm:$0xff] %v1504
      %1646 = vst.msk [vmem:[%s250 + $0x178] sm:$0xff] %vm1599, %v1506
      %1647 = vst [vmem:[%s250 + $0x180] sm:$0xff] %v1510
      %1648 = vst.msk [vmem:[%s250 + $0x188] sm:$0xff] %vm1599, %v1512
      %1649 = vst [vmem:[%s250 + $0x190] sm:$0xff] %v1514
      %1650 = vst.msk [vmem:[%s250 + $0x198] sm:$0xff] %vm1599, %v1516
      %1651 = vst [vmem:[%s250 + $0x1a0] sm:$0xff] %v1520
      %1652 = vst.msk [vmem:[%s250 + $0x1a8] sm:$0xff] %vm1599, %v1522
      %1653 = vst [vmem:[%s250 + $0x1b0] sm:$0xff] %v1524
      %1654 = vst.msk [vmem:[%s250 + $0x1b8] sm:$0xff] %vm1599, %v1526
      %1655 = vst [vmem:[%s250 + $0x1c0] sm:$0xff] %v1530
      %1656 = vst.msk [vmem:[%s250 + $0x1c8] sm:$0xff] %vm1599, %v1532
      %1657 = vst [vmem:[%s250 + $0x1d0] sm:$0xff] %v1534
      %1658 = vst.msk [vmem:[%s250 + $0x1d8] sm:$0xff] %vm1599, %v1536
      %1659 = vst [vmem:[%s250 + $0x1e0] sm:$0xff] %v1540
      %1660 = vst.msk [vmem:[%s250 + $0x1e8] sm:$0xff] %vm1599, %v1542
      %1661 = vst [vmem:[%s250 + $0x1f0] sm:$0xff] %v1544
      %1662 = vst.msk [vmem:[%s250 + $0x1f8] sm:$0xff] %vm1599, %v1546
      %1663 = vst [vmem:[%s250 + $0x200] sm:$0xff] %v1550
      %1664 = vst.msk [vmem:[%s250 + $0x208] sm:$0xff] %vm1599, %v1552
      %1665 = vst [vmem:[%s250 + $0x210] sm:$0xff] %v1554
      %1666 = vst.msk [vmem:[%s250 + $0x218] sm:$0xff] %vm1599, %v1556
      %1667 = vst [vmem:[%s250 + $0x220] sm:$0xff] %v1560
      %1668 = vst.msk [vmem:[%s250 + $0x228] sm:$0xff] %vm1599, %v1562
      %1669 = vst [vmem:[%s250 + $0x230] sm:$0xff] %v1564
      %1670 = vst.msk [vmem:[%s250 + $0x238] sm:$0xff] %vm1599, %v1566
      %1671 = vst [vmem:[%s250 + $0x240] sm:$0xff] %v1570
      %1672 = vst.msk [vmem:[%s250 + $0x248] sm:$0xff] %vm1599, %v1572
      %1673 = vst [vmem:[%s250 + $0x250] sm:$0xff] %v1574
      %1674 = vst.msk [vmem:[%s250 + $0x258] sm:$0xff] %vm1599, %v1576
      %1675 = vst [vmem:[%s250 + $0x260] sm:$0xff] %v1580
      %1676 = vst.msk [vmem:[%s250 + $0x268] sm:$0xff] %vm1599, %v1582
      %1677 = vst [vmem:[%s250 + $0x270] sm:$0xff] %v1584
      %1678 = vst.msk [vmem:[%s250 + $0x278] sm:$0xff] %vm1599, %v1586
      %1679 = vst [vmem:[%s250 + $0x280] sm:$0xff] %v1590
      %1680 = vst.msk [vmem:[%s250 + $0x288] sm:$0xff] %vm1599, %v1592
      %1681 = vst [vmem:[%s250 + $0x290] sm:$0xff] %v1594
      %1682 = vst.msk [vmem:[%s250 + $0x298] sm:$0xff] %vm1599, %v1596
      %s1683 = smul.u32 42, %s16
      %p1684 = scmp.lt.s32.totalorder %s1683, 83
      %s1685 = scalar_select %p1684, %s1683, 83
      %s1686 = smul.addr %s1685, 2
      %s1687 = smul.addr %s1686, 8
      %s1688 = scalar_lea.vmem %s5, %s1687
      // Predicated region
      $region41: #{tpu_custom_call.1} parent=39 // pred_check
        %p1689 = pneg %p149
      $region42: #{tpu_custom_call.1} parent=39 // pred_check_branch
        %1691 = sbr.rel (%p1689) target = $region44
      $region43: #{tpu_custom_call.1} parent=39 // pred_region
        %s1692 = smul.u32 42, %s16
      $region44: #{tpu_custom_call.1} parent=39 // pred_fallthru
        _
    $region40: #{tpu_custom_call.1} parent=5 // pred_fallthru
      _
    %p1693 = scmp.le.s32.totalorder 2, %s11
    // Predicated region
    $region45: #{tpu_custom_call.1} parent=5 // pred_check
      %p1694 = pneg %p1693
    $region46: #{tpu_custom_call.1} parent=5 // pred_check_branch
      %1696 = sbr.rel (%p1694) target = $region48
    $region47: #{tpu_custom_call.1} parent=5 // pred_region
      %s1697 = ssub.s32 %s11, 2
      // Predicated region
      $region49: #{tpu_custom_call.1} parent=47 // pred_check
        %p1698 = pneg %p155
      $region50: #{tpu_custom_call.1} parent=47 // pred_check_branch
        %1700 = sbr.rel (%p1698) target = $region52
      $region51: #{tpu_custom_call.1} parent=47 // pred_region
        %s1701 = smul.u32 42, %s17
        %p1702 = scmp.lt.s32.totalorder %s1701, 83
        %s1703 = scalar_select %p1702, %s1701, 83
        %s1704 = smul.addr %s1703, 2
        %s1705 = smul.addr %s1704, 8
        %s1706 = scalar_lea.vmem %s5, %s1705
      $region52: #{tpu_custom_call.1} parent=47 // pred_fallthru
        _
    $region48: #{tpu_custom_call.1} parent=5 // pred_fallthru
      _
  $region6: #{tpu_custom_call.1} parent=0 // loop_footer
    %s15 = sadd.s32 1, %s11
  $region7: #{tpu_custom_call.1} parent=0 // loop_footer_branch
    %10 = sbr.rel target = $region3
  $region8: #{tpu_custom_call.1} parent=0 // loop_exit
    _

</llo_original>
